<compile_context>
chip_gen: v7x
topology: tpu7x:2x2x1
jax: 0.10.0
libtpu: 0.0.40
codegen_flags: <defaults>
</compile_context>

<pallas_src>
import jax
import jax.numpy as jnp
from jax.experimental import pallas as pl
from jax.experimental.pallas import tpu as pltpu

# ---------------- synthetic "CLIP ViT-L/14" configuration -------------------
IMG_SIZE = 224                     # ClipSimilarity.size for 'ViT-L/14'
PATCH = 14
GRID = IMG_SIZE // PATCH           # 16
NUM_PATCHES = GRID * GRID          # 256
PATCH_DIM = 3 * PATCH * PATCH      # 588
PATCH_DIM_PAD = 640                # padded to a multiple of 128
EMBED_DIM = 128                    # synthetic joint embedding dim
TXT_EMB = 128                      # synthetic token embedding dim
VOCAB = 64
SEQ = 8

CLIP_MEAN = jnp.array([0.48145466, 0.4578275, 0.40821073], jnp.float32)
CLIP_STD = jnp.array([0.26862954, 0.26130258, 0.27577711], jnp.float32)


# ------------------------------ fused kernel --------------------------------
def _clip_sim_kernel(p0_ref, p1_ref, w_img_ref, b_img_ref,
                     e0_ref, e1_ref, w_txt_ref, sims_ref):
    # p0/p1_ref : (TB, 256, 640) bf16 patch matrices (mean/std folded into W)
    # w_img_ref : (640, 128) bf16   b_img_ref : (1, 128) f32
    # e0/e1_ref : (TB, SEQ, 128) f32 token embeddings
    # w_txt_ref : (128, 128) bf16
    # sims_ref  : (TB, 4) f32  -> [sim_0, sim_1, sim_direction, sim_image]
    eps = jnp.float32(1e-8)

    def l2_normalize(v):
        nsq = jnp.sum(v * v, axis=1, keepdims=True)
        return v * jax.lax.rsqrt(jnp.maximum(nsq, jnp.float32(1e-24)))

    def img_feat(p_ref):
        # pool patches BEFORE projecting (exact: encoder is linear)
        pooled = jnp.mean(p_ref[...].astype(jnp.float32), axis=1)      # (TB, 640)
        proj = jnp.dot(pooled.astype(jnp.bfloat16), w_img_ref[...],
                       preferred_element_type=jnp.float32)             # (TB, 128)
        proj = proj + b_img_ref[...]                                   # folded mean/std
        return l2_normalize(proj)

    def txt_feat(e_ref):
        pooled = jnp.mean(e_ref[...], axis=1)                          # (TB, 128)
        proj = jnp.dot(pooled.astype(jnp.bfloat16), w_txt_ref[...],
                       preferred_element_type=jnp.float32)
        return l2_normalize(proj)

    if0 = img_feat(p0_ref)
    if1 = img_feat(p1_ref)
    tf0 = txt_feat(e0_ref)
    tf1 = txt_feat(e1_ref)

    def cos(a, b):
        # F.cosine_similarity(dim=1, eps=1e-8) semantics
        dot = jnp.sum(a * b, axis=1, keepdims=True)
        denom_sq = (jnp.sum(a * a, axis=1, keepdims=True) *
                    jnp.sum(b * b, axis=1, keepdims=True))
        return dot * jax.lax.rsqrt(jnp.maximum(denom_sq, eps * eps))

    s0 = cos(if0, tf0)            # sim_0
    s1 = cos(if1, tf1)            # sim_1
    sd = cos(if1 - if0, tf1 - tf0)  # sim_direction
    si = cos(if0, if1)            # sim_image

    # pack the four (TB,1) results into one dense (TB,4) store
    col = jax.lax.broadcasted_iota(jnp.int32, sims_ref.shape, 1)
    sims_ref[...] = jnp.where(col == 0, s0,
                    jnp.where(col == 1, s1,
                    jnp.where(col == 2, sd, si)))


# ------------------------------ host-side prep -------------------------------
def _patchify(image_nchw):
    """(B, 3, H, W) -> (B, NUM_PATCHES, PATCH_DIM_PAD) bf16 patch matrix."""
    B = image_nchw.shape[0]
    # TODO(synk): jax.image.resize 'bicubic' approximates torch F.interpolate
    # bicubic(align_corners=False); boundary handling may differ slightly.
    x = jax.image.resize(image_nchw.astype(jnp.float32),
                         (B, 3, IMG_SIZE, IMG_SIZE), method="bicubic")
    x = jnp.transpose(x, (0, 2, 3, 1))                                  # NHWC
    x = x.reshape(B, GRID, PATCH, GRID, PATCH, 3)
    x = jnp.transpose(x, (0, 1, 3, 2, 4, 5)).reshape(B, NUM_PATCHES, PATCH_DIM)
    x = jnp.pad(x, ((0, 0), (0, 0), (0, PATCH_DIM_PAD - PATCH_DIM)))
    return x.astype(jnp.bfloat16)


def _fold_image_weights(w_img):
    """Fold CLIP mean/std into the patch projection: x@W' + b == ((x-m)/s)@W."""
    # per-patch-position layout (ph*pw, C) flattened (C fastest), matching _patchify
    mean_vec = jnp.broadcast_to(CLIP_MEAN, (PATCH * PATCH, 3)).reshape(PATCH_DIM)
    inv_std = 1.0 / jnp.broadcast_to(CLIP_STD, (PATCH * PATCH, 3)).reshape(PATCH_DIM)
    w_folded = w_img * inv_std[:, None]                                 # (588, D)
    bias = -(mean_vec * inv_std) @ w_img                                # (D,)
    w_folded = jnp.pad(w_folded, ((0, PATCH_DIM_PAD - PATCH_DIM), (0, 0)))
    return w_folded.astype(jnp.bfloat16), bias.reshape(1, EMBED_DIM).astype(jnp.float32)


# ------------------------------ public forward -------------------------------
def clip_similarity_forward(image_0, image_1, tokens_0, tokens_1, params):
    """Mirrors ClipSimilarity.forward -> (sim_0, sim_1, sim_direction, sim_image)."""
    w_img, txt_tbl, w_txt = params
    B = image_0.shape[0]

    p0 = _patchify(image_0)
    p1 = _patchify(image_1)
    w_img_f, b_img = _fold_image_weights(w_img)
    w_txt_bf = w_txt.astype(jnp.bfloat16)

    # TODO(synk): clip.tokenize / WordNetLemmatizer operate on python strings;
    # the caller supplies integer token ids which are gathered into embeddings.
    e0 = jnp.take(txt_tbl, tokens_0, axis=0).astype(jnp.float32)        # (B, T, E)
    e1 = jnp.take(txt_tbl, tokens_1, axis=0).astype(jnp.float32)

    # batch tile: full batch when small, else 8 rows per grid step
    # (bf16 double-buffered blocks stay well under 32 MiB scoped VMEM on v7x)
    tb = B if B <= 8 else 8
    grid = (pl.cdiv(B, tb),)

    sims = pl.pallas_call(
        _clip_sim_kernel,
        out_shape=jax.ShapeDtypeStruct((B, 4), jnp.float32),
        grid=grid,
        in_specs=[
            pl.BlockSpec((tb, NUM_PATCHES, PATCH_DIM_PAD), lambda i: (i, 0, 0)),
            pl.BlockSpec((tb, NUM_PATCHES, PATCH_DIM_PAD), lambda i: (i, 0, 0)),
            pl.BlockSpec((PATCH_DIM_PAD, EMBED_DIM), lambda i: (0, 0)),
            pl.BlockSpec((1, EMBED_DIM), lambda i: (0, 0)),
            pl.BlockSpec((tb, SEQ, TXT_EMB), lambda i: (i, 0, 0)),
            pl.BlockSpec((tb, SEQ, TXT_EMB), lambda i: (i, 0, 0)),
            pl.BlockSpec((TXT_EMB, EMBED_DIM), lambda i: (0, 0)),
        ],
        out_specs=pl.BlockSpec((tb, 4), lambda i: (i, 0)),
        compiler_params=pltpu.CompilerParams(
            dimension_semantics=("parallel",)),
    )(p0, p1, w_img_f, b_img, e0, e1, w_txt_bf)

    sim_0 = sims[:, 0]
    sim_1 = sims[:, 1]
    sim_direction = sims[:, 2]
    sim_image = sims[:, 3]
    return sim_0, sim_1, sim_direction, sim_image


def init_params():
    kw, ke, kt = jax.random.split(jax.random.PRNGKey(42), 3)
    w_img = 0.02 * jax.random.normal(kw, (PATCH_DIM, EMBED_DIM), jnp.float32)
    txt_tbl = 0.02 * jax.random.normal(ke, (VOCAB, TXT_EMB), jnp.float32)
    w_txt = 0.02 * jax.random.normal(kt, (TXT_EMB, EMBED_DIM), jnp.float32)
    return w_img, txt_tbl, w_txt


if __name__ == "__main__":
    key = jax.random.PRNGKey(0)
    k1, k2, k3, k4 = jax.random.split(key, 4)

    B, C, H, W = 2, 3, 16, 16
    image_0 = jax.random.uniform(k1, (B, C, H, W), jnp.float32)
    image_1 = jax.random.uniform(k2, (B, C, H, W), jnp.float32)
    tokens_0 = jax.random.randint(k3, (B, SEQ), 0, VOCAB, dtype=jnp.int32)
    tokens_1 = jax.random.randint(k4, (B, SEQ), 0, VOCAB, dtype=jnp.int32)

    params = init_params()

    fwd = jax.jit(clip_similarity_forward)
    sims = fwd(image_0, image_1, tokens_0, tokens_1, params)
    sims = jax.block_until_ready(sims)

    sim_0, sim_1, sim_direction, sim_image = sims
    assert sim_0.shape == (B,) and sim_1.shape == (B,)
    assert sim_direction.shape == (B,) and sim_image.shape == (B,)
    for s in sims:
        assert bool(jnp.all(jnp.isfinite(s)))
        assert bool(jnp.all(jnp.abs(s) <= 1.0 + 1e-3))
    print("KERNEL_OK")
</pallas_src>

<mosaic_0001>
module attributes {stable_mosaic.version = 11 : i64} {
  func.func @_clip_sim_kernel(%arg0: i32, %arg1: memref<2x256x640xbf16, #tpu.memory_space<vmem>>, %arg2: memref<2x256x640xbf16, #tpu.memory_space<vmem>>, %arg3: memref<640x128xbf16, #tpu.memory_space<vmem>>, %arg4: memref<1x128xf32, #tpu.memory_space<vmem>>, %arg5: memref<2x8x128xf32, #tpu.memory_space<vmem>>, %arg6: memref<2x8x128xf32, #tpu.memory_space<vmem>>, %arg7: memref<128x128xbf16, #tpu.memory_space<vmem>>, %arg8: memref<2x4xf32, #tpu.memory_space<vmem>>) attributes {dimension_semantics = [#tpu.dimension_semantics<parallel>], iteration_bounds = array<i64: 1>, scalar_prefetch = 0 : i64, scratch_operands = 0 : i64, tpu.core_type = #tpu.core_type<tc>, window_params = [{transform_indices = @transform_0, window_bounds = array<i64: 2, 256, 640>}, {transform_indices = @transform_1, window_bounds = array<i64: 2, 256, 640>}, {pipeline_mode = #tpu.pipeline_mode<synchronous>, transform_indices = @transform_2, window_bounds = array<i64: 640, 128>}, {pipeline_mode = #tpu.pipeline_mode<synchronous>, transform_indices = @transform_3, window_bounds = array<i64: 1, 128>}, {transform_indices = @transform_4, window_bounds = array<i64: 2, 8, 128>}, {transform_indices = @transform_5, window_bounds = array<i64: 2, 8, 128>}, {pipeline_mode = #tpu.pipeline_mode<synchronous>, transform_indices = @transform_6, window_bounds = array<i64: 128, 128>}, {transform_indices = @transform_7, window_bounds = array<i64: 2, 4>}]} {
    %c0 = arith.constant 0 : index
    %c0_0 = arith.constant 0 : index
    %c0_1 = arith.constant 0 : index
    %0 = vector.load %arg1[%c0, %c0_0, %c0_1] : memref<2x256x640xbf16, #tpu.memory_space<vmem>>, vector<2x256x640xbf16>
    %1 = arith.extf %0 : vector<2x256x640xbf16> to vector<2x256x640xf32>
    %cst = arith.constant dense<0.000000e+00> : vector<2x640xf32>
    %2 = vector.multi_reduction <add>, %1, %cst [1] : vector<2x256x640xf32> to vector<2x640xf32>
    %cst_2 = arith.constant 2.560000e+02 : f32
    %3 = vector.broadcast %cst_2 : f32 to vector<2x640xf32>
    %4 = arith.divf %2, %3 : vector<2x640xf32>
    %5 = arith.truncf %4 : vector<2x640xf32> to vector<2x640xbf16>
    %c0_3 = arith.constant 0 : index
    %c0_4 = arith.constant 0 : index
    %6 = vector.load %arg3[%c0_3, %c0_4] : memref<640x128xbf16, #tpu.memory_space<vmem>>, vector<640x128xbf16>
    %cst_5 = arith.constant dense<0.000000e+00> : vector<2x128xf32>
    %7 = tpu.matmul %5, %6, %cst_5 {dimension_numbers = #tpu.dot_dimension_numbers<[1], [0], [0], [1], [0, 0, 1, 1], [], []>} : vector<2x640xbf16>, vector<640x128xbf16>, vector<2x128xf32> -> vector<2x128xf32>
    %c0_6 = arith.constant 0 : index
    %c0_7 = arith.constant 0 : index
    %8 = vector.load %arg4[%c0_6, %c0_7] : memref<1x128xf32, #tpu.memory_space<vmem>>, vector<1x128xf32>
    %9 = vector.broadcast %8 : vector<1x128xf32> to vector<2x128xf32>
    %10 = arith.addf %7, %9 : vector<2x128xf32>
    %11 = arith.mulf %10, %10 : vector<2x128xf32>
    %cst_8 = arith.constant dense<0.000000e+00> : vector<2xf32>
    %12 = vector.multi_reduction <add>, %11, %cst_8 [1] : vector<2x128xf32> to vector<2xf32>
    %13 = vector.shape_cast %12 : vector<2xf32> to vector<2x1xf32>
    %cst_9 = arith.constant 1.000000e-24 : f32
    %14 = vector.broadcast %cst_9 : f32 to vector<2x1xf32>
    %15 = arith.maximumf %13, %14 : vector<2x1xf32>
    %16 = math.rsqrt %15 : vector<2x1xf32>
    %17 = vector.broadcast %16 : vector<2x1xf32> to vector<2x128xf32>
    %18 = arith.mulf %10, %17 : vector<2x128xf32>
    %c0_10 = arith.constant 0 : index
    %c0_11 = arith.constant 0 : index
    %c0_12 = arith.constant 0 : index
    %19 = vector.load %arg2[%c0_10, %c0_11, %c0_12] : memref<2x256x640xbf16, #tpu.memory_space<vmem>>, vector<2x256x640xbf16>
    %20 = arith.extf %19 : vector<2x256x640xbf16> to vector<2x256x640xf32>
    %cst_13 = arith.constant dense<0.000000e+00> : vector<2x640xf32>
    %21 = vector.multi_reduction <add>, %20, %cst_13 [1] : vector<2x256x640xf32> to vector<2x640xf32>
    %cst_14 = arith.constant 2.560000e+02 : f32
    %22 = vector.broadcast %cst_14 : f32 to vector<2x640xf32>
    %23 = arith.divf %21, %22 : vector<2x640xf32>
    %24 = arith.truncf %23 : vector<2x640xf32> to vector<2x640xbf16>
    %c0_15 = arith.constant 0 : index
    %c0_16 = arith.constant 0 : index
    %25 = vector.load %arg3[%c0_15, %c0_16] : memref<640x128xbf16, #tpu.memory_space<vmem>>, vector<640x128xbf16>
    %cst_17 = arith.constant dense<0.000000e+00> : vector<2x128xf32>
    %26 = tpu.matmul %24, %25, %cst_17 {dimension_numbers = #tpu.dot_dimension_numbers<[1], [0], [0], [1], [0, 0, 1, 1], [], []>} : vector<2x640xbf16>, vector<640x128xbf16>, vector<2x128xf32> -> vector<2x128xf32>
    %c0_18 = arith.constant 0 : index
    %c0_19 = arith.constant 0 : index
    %27 = vector.load %arg4[%c0_18, %c0_19] : memref<1x128xf32, #tpu.memory_space<vmem>>, vector<1x128xf32>
    %28 = vector.broadcast %27 : vector<1x128xf32> to vector<2x128xf32>
    %29 = arith.addf %26, %28 : vector<2x128xf32>
    %30 = arith.mulf %29, %29 : vector<2x128xf32>
    %cst_20 = arith.constant dense<0.000000e+00> : vector<2xf32>
    %31 = vector.multi_reduction <add>, %30, %cst_20 [1] : vector<2x128xf32> to vector<2xf32>
    %32 = vector.shape_cast %31 : vector<2xf32> to vector<2x1xf32>
    %cst_21 = arith.constant 1.000000e-24 : f32
    %33 = vector.broadcast %cst_21 : f32 to vector<2x1xf32>
    %34 = arith.maximumf %32, %33 : vector<2x1xf32>
    %35 = math.rsqrt %34 : vector<2x1xf32>
    %36 = vector.broadcast %35 : vector<2x1xf32> to vector<2x128xf32>
    %37 = arith.mulf %29, %36 : vector<2x128xf32>
    %c0_22 = arith.constant 0 : index
    %c0_23 = arith.constant 0 : index
    %c0_24 = arith.constant 0 : index
    %38 = vector.load %arg5[%c0_22, %c0_23, %c0_24] : memref<2x8x128xf32, #tpu.memory_space<vmem>>, vector<2x8x128xf32>
    %cst_25 = arith.constant dense<0.000000e+00> : vector<2x128xf32>
    %39 = vector.multi_reduction <add>, %38, %cst_25 [1] : vector<2x8x128xf32> to vector<2x128xf32>
    %cst_26 = arith.constant 8.000000e+00 : f32
    %40 = vector.broadcast %cst_26 : f32 to vector<2x128xf32>
    %41 = arith.divf %39, %40 : vector<2x128xf32>
    %42 = arith.truncf %41 : vector<2x128xf32> to vector<2x128xbf16>
    %c0_27 = arith.constant 0 : index
    %c0_28 = arith.constant 0 : index
    %43 = vector.load %arg7[%c0_27, %c0_28] : memref<128x128xbf16, #tpu.memory_space<vmem>>, vector<128x128xbf16>
    %cst_29 = arith.constant dense<0.000000e+00> : vector<2x128xf32>
    %44 = tpu.matmul %42, %43, %cst_29 {dimension_numbers = #tpu.dot_dimension_numbers<[1], [0], [0], [1], [0, 0, 1, 1], [], []>} : vector<2x128xbf16>, vector<128x128xbf16>, vector<2x128xf32> -> vector<2x128xf32>
    %45 = arith.mulf %44, %44 : vector<2x128xf32>
    %cst_30 = arith.constant dense<0.000000e+00> : vector<2xf32>
    %46 = vector.multi_reduction <add>, %45, %cst_30 [1] : vector<2x128xf32> to vector<2xf32>
    %47 = vector.shape_cast %46 : vector<2xf32> to vector<2x1xf32>
    %cst_31 = arith.constant 1.000000e-24 : f32
    %48 = vector.broadcast %cst_31 : f32 to vector<2x1xf32>
    %49 = arith.maximumf %47, %48 : vector<2x1xf32>
    %50 = math.rsqrt %49 : vector<2x1xf32>
    %51 = vector.broadcast %50 : vector<2x1xf32> to vector<2x128xf32>
    %52 = arith.mulf %44, %51 : vector<2x128xf32>
    %c0_32 = arith.constant 0 : index
    %c0_33 = arith.constant 0 : index
    %c0_34 = arith.constant 0 : index
    %53 = vector.load %arg6[%c0_32, %c0_33, %c0_34] : memref<2x8x128xf32, #tpu.memory_space<vmem>>, vector<2x8x128xf32>
    %cst_35 = arith.constant dense<0.000000e+00> : vector<2x128xf32>
    %54 = vector.multi_reduction <add>, %53, %cst_35 [1] : vector<2x8x128xf32> to vector<2x128xf32>
    %cst_36 = arith.constant 8.000000e+00 : f32
    %55 = vector.broadcast %cst_36 : f32 to vector<2x128xf32>
    %56 = arith.divf %54, %55 : vector<2x128xf32>
    %57 = arith.truncf %56 : vector<2x128xf32> to vector<2x128xbf16>
    %c0_37 = arith.constant 0 : index
    %c0_38 = arith.constant 0 : index
    %58 = vector.load %arg7[%c0_37, %c0_38] : memref<128x128xbf16, #tpu.memory_space<vmem>>, vector<128x128xbf16>
    %cst_39 = arith.constant dense<0.000000e+00> : vector<2x128xf32>
    %59 = tpu.matmul %57, %58, %cst_39 {dimension_numbers = #tpu.dot_dimension_numbers<[1], [0], [0], [1], [0, 0, 1, 1], [], []>} : vector<2x128xbf16>, vector<128x128xbf16>, vector<2x128xf32> -> vector<2x128xf32>
    %60 = arith.mulf %59, %59 : vector<2x128xf32>
    %cst_40 = arith.constant dense<0.000000e+00> : vector<2xf32>
    %61 = vector.multi_reduction <add>, %60, %cst_40 [1] : vector<2x128xf32> to vector<2xf32>
    %62 = vector.shape_cast %61 : vector<2xf32> to vector<2x1xf32>
    %cst_41 = arith.constant 1.000000e-24 : f32
    %63 = vector.broadcast %cst_41 : f32 to vector<2x1xf32>
    %64 = arith.maximumf %62, %63 : vector<2x1xf32>
    %65 = math.rsqrt %64 : vector<2x1xf32>
    %66 = vector.broadcast %65 : vector<2x1xf32> to vector<2x128xf32>
    %67 = arith.mulf %59, %66 : vector<2x128xf32>
    %68 = arith.mulf %18, %52 : vector<2x128xf32>
    %cst_42 = arith.constant dense<0.000000e+00> : vector<2xf32>
    %69 = vector.multi_reduction <add>, %68, %cst_42 [1] : vector<2x128xf32> to vector<2xf32>
    %70 = vector.shape_cast %69 : vector<2xf32> to vector<2x1xf32>
    %71 = arith.mulf %18, %18 : vector<2x128xf32>
    %cst_43 = arith.constant dense<0.000000e+00> : vector<2xf32>
    %72 = vector.multi_reduction <add>, %71, %cst_43 [1] : vector<2x128xf32> to vector<2xf32>
    %73 = vector.shape_cast %72 : vector<2xf32> to vector<2x1xf32>
    %74 = arith.mulf %52, %52 : vector<2x128xf32>
    %cst_44 = arith.constant dense<0.000000e+00> : vector<2xf32>
    %75 = vector.multi_reduction <add>, %74, %cst_44 [1] : vector<2x128xf32> to vector<2xf32>
    %76 = vector.shape_cast %75 : vector<2xf32> to vector<2x1xf32>
    %77 = arith.mulf %73, %76 : vector<2x1xf32>
    %cst_45 = arith.constant 9.99999993E-9 : f32
    %cst_46 = arith.constant 9.99999993E-9 : f32
    %78 = arith.mulf %cst_45, %cst_46 : f32
    %79 = vector.broadcast %78 : f32 to vector<2x1xf32>
    %80 = arith.maximumf %77, %79 : vector<2x1xf32>
    %81 = math.rsqrt %80 : vector<2x1xf32>
    %82 = arith.mulf %70, %81 : vector<2x1xf32>
    %83 = arith.mulf %37, %67 : vector<2x128xf32>
    %cst_47 = arith.constant dense<0.000000e+00> : vector<2xf32>
    %84 = vector.multi_reduction <add>, %83, %cst_47 [1] : vector<2x128xf32> to vector<2xf32>
    %85 = vector.shape_cast %84 : vector<2xf32> to vector<2x1xf32>
    %86 = arith.mulf %37, %37 : vector<2x128xf32>
    %cst_48 = arith.constant dense<0.000000e+00> : vector<2xf32>
    %87 = vector.multi_reduction <add>, %86, %cst_48 [1] : vector<2x128xf32> to vector<2xf32>
    %88 = vector.shape_cast %87 : vector<2xf32> to vector<2x1xf32>
    %89 = arith.mulf %67, %67 : vector<2x128xf32>
    %cst_49 = arith.constant dense<0.000000e+00> : vector<2xf32>
    %90 = vector.multi_reduction <add>, %89, %cst_49 [1] : vector<2x128xf32> to vector<2xf32>
    %91 = vector.shape_cast %90 : vector<2xf32> to vector<2x1xf32>
    %92 = arith.mulf %88, %91 : vector<2x1xf32>
    %cst_50 = arith.constant 9.99999993E-9 : f32
    %cst_51 = arith.constant 9.99999993E-9 : f32
    %93 = arith.mulf %cst_50, %cst_51 : f32
    %94 = vector.broadcast %93 : f32 to vector<2x1xf32>
    %95 = arith.maximumf %92, %94 : vector<2x1xf32>
    %96 = math.rsqrt %95 : vector<2x1xf32>
    %97 = arith.mulf %85, %96 : vector<2x1xf32>
    %98 = arith.subf %37, %18 : vector<2x128xf32>
    %99 = arith.subf %67, %52 : vector<2x128xf32>
    %100 = arith.mulf %98, %99 : vector<2x128xf32>
    %cst_52 = arith.constant dense<0.000000e+00> : vector<2xf32>
    %101 = vector.multi_reduction <add>, %100, %cst_52 [1] : vector<2x128xf32> to vector<2xf32>
    %102 = vector.shape_cast %101 : vector<2xf32> to vector<2x1xf32>
    %103 = arith.mulf %98, %98 : vector<2x128xf32>
    %cst_53 = arith.constant dense<0.000000e+00> : vector<2xf32>
    %104 = vector.multi_reduction <add>, %103, %cst_53 [1] : vector<2x128xf32> to vector<2xf32>
    %105 = vector.shape_cast %104 : vector<2xf32> to vector<2x1xf32>
    %106 = arith.mulf %99, %99 : vector<2x128xf32>
    %cst_54 = arith.constant dense<0.000000e+00> : vector<2xf32>
    %107 = vector.multi_reduction <add>, %106, %cst_54 [1] : vector<2x128xf32> to vector<2xf32>
    %108 = vector.shape_cast %107 : vector<2xf32> to vector<2x1xf32>
    %109 = arith.mulf %105, %108 : vector<2x1xf32>
    %cst_55 = arith.constant 9.99999993E-9 : f32
    %cst_56 = arith.constant 9.99999993E-9 : f32
    %110 = arith.mulf %cst_55, %cst_56 : f32
    %111 = vector.broadcast %110 : f32 to vector<2x1xf32>
    %112 = arith.maximumf %109, %111 : vector<2x1xf32>
    %113 = math.rsqrt %112 : vector<2x1xf32>
    %114 = arith.mulf %102, %113 : vector<2x1xf32>
    %115 = arith.mulf %18, %37 : vector<2x128xf32>
    %cst_57 = arith.constant dense<0.000000e+00> : vector<2xf32>
    %116 = vector.multi_reduction <add>, %115, %cst_57 [1] : vector<2x128xf32> to vector<2xf32>
    %117 = vector.shape_cast %116 : vector<2xf32> to vector<2x1xf32>
    %118 = arith.mulf %18, %18 : vector<2x128xf32>
    %cst_58 = arith.constant dense<0.000000e+00> : vector<2xf32>
    %119 = vector.multi_reduction <add>, %118, %cst_58 [1] : vector<2x128xf32> to vector<2xf32>
    %120 = vector.shape_cast %119 : vector<2xf32> to vector<2x1xf32>
    %121 = arith.mulf %37, %37 : vector<2x128xf32>
    %cst_59 = arith.constant dense<0.000000e+00> : vector<2xf32>
    %122 = vector.multi_reduction <add>, %121, %cst_59 [1] : vector<2x128xf32> to vector<2xf32>
    %123 = vector.shape_cast %122 : vector<2xf32> to vector<2x1xf32>
    %124 = arith.mulf %120, %123 : vector<2x1xf32>
    %cst_60 = arith.constant 9.99999993E-9 : f32
    %cst_61 = arith.constant 9.99999993E-9 : f32
    %125 = arith.mulf %cst_60, %cst_61 : f32
    %126 = vector.broadcast %125 : f32 to vector<2x1xf32>
    %127 = arith.maximumf %124, %126 : vector<2x1xf32>
    %128 = math.rsqrt %127 : vector<2x1xf32>
    %129 = arith.mulf %117, %128 : vector<2x1xf32>
    %130 = tpu.iota {dimensions = array<i32: 1>} : vector<2x4xi32>
    %c0_i32 = arith.constant 0 : i32
    %131 = vector.broadcast %c0_i32 : i32 to vector<2x4xi32>
    %132 = arith.cmpi eq, %130, %131 : vector<2x4xi32>
    %c1_i32 = arith.constant 1 : i32
    %133 = vector.broadcast %c1_i32 : i32 to vector<2x4xi32>
    %134 = arith.cmpi eq, %130, %133 : vector<2x4xi32>
    %c2_i32 = arith.constant 2 : i32
    %135 = vector.broadcast %c2_i32 : i32 to vector<2x4xi32>
    %136 = arith.cmpi eq, %130, %135 : vector<2x4xi32>
    %137 = vector.shape_cast %114 : vector<2x1xf32> to vector<2x1xf32>
    %138 = vector.broadcast %137 : vector<2x1xf32> to vector<2x4xf32>
    %139 = vector.shape_cast %129 : vector<2x1xf32> to vector<2x1xf32>
    %140 = vector.broadcast %139 : vector<2x1xf32> to vector<2x4xf32>
    %141 = arith.select %136, %138, %140 : vector<2x4xi1>, vector<2x4xf32>
    %142 = vector.shape_cast %97 : vector<2x1xf32> to vector<2x1xf32>
    %143 = vector.broadcast %142 : vector<2x1xf32> to vector<2x4xf32>
    %144 = arith.select %134, %143, %141 : vector<2x4xi1>, vector<2x4xf32>
    %145 = vector.shape_cast %82 : vector<2x1xf32> to vector<2x1xf32>
    %146 = vector.broadcast %145 : vector<2x1xf32> to vector<2x4xf32>
    %147 = arith.select %132, %146, %144 : vector<2x4xi1>, vector<2x4xf32>
    %c0_62 = arith.constant 0 : index
    %c0_63 = arith.constant 0 : index
    %148 = vector.load %arg8[%c0_62, %c0_63] : memref<2x4xf32, #tpu.memory_space<vmem>>, vector<2x4xf32>
    tpu.vector_store %arg8[%c0_62, %c0_63], %147 {strides = array<i32>} : memref<2x4xf32, #tpu.memory_space<vmem>>, vector<2x4xf32>,
    return
  }
  func.func @transform_0(%arg0: i32) -> (i32, i32, i32) {
    %c0_i32 = arith.constant 0 : i32
    %c0_i32_0 = arith.constant 0 : i32
    %c0_i32_1 = arith.constant 0 : i32
    return %arg0, %c0_i32, %c0_i32_0 : i32, i32, i32
  }
  func.func @transform_1(%arg0: i32) -> (i32, i32, i32) {
    %c0_i32 = arith.constant 0 : i32
    %c0_i32_0 = arith.constant 0 : i32
    %c0_i32_1 = arith.constant 0 : i32
    return %arg0, %c0_i32, %c0_i32_0 : i32, i32, i32
  }
  func.func @transform_2(%arg0: i32) -> (i32, i32) {
    %c0_i32 = arith.constant 0 : i32
    %c0_i32_0 = arith.constant 0 : i32
    %c0_i32_1 = arith.constant 0 : i32
    return %c0_i32, %c0_i32_0 : i32, i32
  }
  func.func @transform_3(%arg0: i32) -> (i32, i32) {
    %c0_i32 = arith.constant 0 : i32
    %c0_i32_0 = arith.constant 0 : i32
    %c0_i32_1 = arith.constant 0 : i32
    return %c0_i32, %c0_i32_0 : i32, i32
  }
  func.func @transform_4(%arg0: i32) -> (i32, i32, i32) {
    %c0_i32 = arith.constant 0 : i32
    %c0_i32_0 = arith.constant 0 : i32
    %c0_i32_1 = arith.constant 0 : i32
    return %arg0, %c0_i32, %c0_i32_0 : i32, i32, i32
  }
  func.func @transform_5(%arg0: i32) -> (i32, i32, i32) {
    %c0_i32 = arith.constant 0 : i32
    %c0_i32_0 = arith.constant 0 : i32
    %c0_i32_1 = arith.constant 0 : i32
    return %arg0, %c0_i32, %c0_i32_0 : i32, i32, i32
  }
  func.func @transform_6(%arg0: i32) -> (i32, i32) {
    %c0_i32 = arith.constant 0 : i32
    %c0_i32_0 = arith.constant 0 : i32
    %c0_i32_1 = arith.constant 0 : i32
    return %c0_i32, %c0_i32_0 : i32, i32
  }
  func.func @transform_7(%arg0: i32) -> (i32, i32) {
    %c0_i32 = arith.constant 0 : i32
    %c0_i32_0 = arith.constant 0 : i32
    return %arg0, %c0_i32 : i32, i32
  }
}

</mosaic_0001>

<llo_original>
// kernel: clip_similarity_forward.1
$region0: #{clip_similarity_forward.1}
  #allocation0 [shape = 'u32[]', space=smem, size = 0x4, offset = 0x4, fixed_abs, tag = 'smem constant byte address 0x4 - core index']
  #allocation1 [shape = 'u32[144,128]{1,0:T(1,128)}', space=vmem, size = 0x12000, scoped, tag = 'internal scratch']
  %s0 = inlined_call_operand.vmem [shape: bf16[2,256,640], index: 0, kind: input, shape index: {}]
  %s1 = inlined_call_operand.vmem [shape: bf16[2,256,640], index: 1, kind: input, shape index: {}]
  %s2 = inlined_call_operand.vmem [shape: bf16[640,128], index: 2, kind: input, shape index: {}]
  %s3 = inlined_call_operand.vmem [shape: f32[1,128], index: 3, kind: input, shape index: {}]
  %s4 = inlined_call_operand.vmem [shape: f32[2,8,128], index: 4, kind: input, shape index: {}]
  %s5 = inlined_call_operand.vmem [shape: f32[2,8,128], index: 5, kind: input, shape index: {}]
  %s6 = inlined_call_operand.vmem [shape: bf16[128,128], index: 6, kind: input, shape index: {}]
  %s7 = inlined_call_operand.vmem [shape: f32[2,4], index: 7, kind: output, shape index: {}]
  %s8 = sld [smem:[#allocation0]]
  $region38: #{clip_similarity_forward.1} parent=0
    _
  %s10 = ssub.s32 1, %s8
  %s11 = scalar_select 0, %s10, %s8
  // Predicated region
  $region2: #{clip_similarity_forward.1} parent=0 // pred_check
    _
  $region3: #{clip_similarity_forward.1} parent=0 // pred_check_branch
    %13 = sbr.rel (0) target = $region5
  $region4: #{clip_similarity_forward.1} parent=0 // pred_region
    _
  $region5: #{clip_similarity_forward.1} parent=0 // pred_fallthru
    _
  // Predicated region
  $region6: #{clip_similarity_forward.1} parent=0 // pred_check
    _
  $region7: #{clip_similarity_forward.1} parent=0 // pred_check_branch
    %15 = sbr.rel (0) target = $region9
  $region8: #{clip_similarity_forward.1} parent=0 // pred_region
    _
  $region9: #{clip_similarity_forward.1} parent=0 // pred_fallthru
    _
  // Predicated region
  $region10: #{clip_similarity_forward.1} parent=0 // pred_check
    _
  $region11: #{clip_similarity_forward.1} parent=0 // pred_check_branch
    %17 = sbr.rel (0) target = $region13
  $region12: #{clip_similarity_forward.1} parent=0 // pred_region
    _
  $region13: #{clip_similarity_forward.1} parent=0 // pred_fallthru
    _
  // Predicated region
  $region14: #{clip_similarity_forward.1} parent=0 // pred_check
    _
  $region15: #{clip_similarity_forward.1} parent=0 // pred_check_branch
    %19 = sbr.rel (0) target = $region17
  $region16: #{clip_similarity_forward.1} parent=0 // pred_region
    _
  $region17: #{clip_similarity_forward.1} parent=0 // pred_fallthru
    _
  // Predicated region
  $region18: #{clip_similarity_forward.1} parent=0 // pred_check
    _
  $region19: #{clip_similarity_forward.1} parent=0 // pred_check_branch
    %21 = sbr.rel (0) target = $region21
  $region20: #{clip_similarity_forward.1} parent=0 // pred_region
    _
  $region21: #{clip_similarity_forward.1} parent=0 // pred_fallthru
    _
  // Predicated region
  $region22: #{clip_similarity_forward.1} parent=0 // pred_check
    _
  $region23: #{clip_similarity_forward.1} parent=0 // pred_check_branch
    %23 = sbr.rel (0) target = $region25
  $region24: #{clip_similarity_forward.1} parent=0 // pred_region
    _
  $region25: #{clip_similarity_forward.1} parent=0 // pred_fallthru
    _
  // Predicated region
  $region26: #{clip_similarity_forward.1} parent=0 // pred_check
    _
  $region27: #{clip_similarity_forward.1} parent=0 // pred_check_branch
    %25 = sbr.rel (0) target = $region29
  $region28: #{clip_similarity_forward.1} parent=0 // pred_region
    _
  $region29: #{clip_similarity_forward.1} parent=0 // pred_fallthru
    _
  %v27 = vld [vmem:[%s0] sm:$0xff]
  %v28 = vld [vmem:[%s0 + $0x8] sm:$0xff]
  %v29 = vld [vmem:[%s0 + $0x10] sm:$0xf]
  %v30 = vld [vmem:[%s0 + $0x14] sm:$0xff]
  %v31 = vld [vmem:[%s0 + $0x1c] sm:$0xff]
  %v32 = vld [vmem:[%s0 + $0x24] sm:$0xf]
  %v33 = vld [vmem:[%s0 + $0x28] sm:$0xff]
  %v34 = vld [vmem:[%s0 + $0x30] sm:$0xff]
  %v35 = vld [vmem:[%s0 + $0x38] sm:$0xf]
  %v36 = vld [vmem:[%s0 + $0x3c] sm:$0xff]
  %v37 = vld [vmem:[%s0 + $0x44] sm:$0xff]
  %v38 = vld [vmem:[%s0 + $0x4c] sm:$0xf]
  %v39 = vld [vmem:[%s0 + $0x50] sm:$0xff]
  %v40 = vld [vmem:[%s0 + $0x58] sm:$0xff]
  %v41 = vld [vmem:[%s0 + $0x60] sm:$0xf]
  %v42 = vld [vmem:[%s0 + $0x64] sm:$0xff]
  %v43 = vld [vmem:[%s0 + $0x6c] sm:$0xff]
  %v44 = vld [vmem:[%s0 + $0x74] sm:$0xf]
  %v45 = vld [vmem:[%s0 + $0x78] sm:$0xff]
  %v46 = vld [vmem:[%s0 + $0x80] sm:$0xff]
  %v47 = vld [vmem:[%s0 + $0x88] sm:$0xf]
  %v48 = vld [vmem:[%s0 + $0x8c] sm:$0xff]
  %v49 = vld [vmem:[%s0 + $0x94] sm:$0xff]
  %v50 = vld [vmem:[%s0 + $0x9c] sm:$0xf]
  %v51 = vld [vmem:[%s0 + $0xa0] sm:$0xff]
  %v52 = vld [vmem:[%s0 + $0xa8] sm:$0xff]
  %v53 = vld [vmem:[%s0 + $0xb0] sm:$0xf]
  %v54 = vld [vmem:[%s0 + $0xb4] sm:$0xff]
  %v55 = vld [vmem:[%s0 + $0xbc] sm:$0xff]
  %v56 = vld [vmem:[%s0 + $0xc4] sm:$0xf]
  %v57 = vld [vmem:[%s0 + $0xc8] sm:$0xff]
  %v58 = vld [vmem:[%s0 + $0xd0] sm:$0xff]
  %v59 = vld [vmem:[%s0 + $0xd8] sm:$0xf]
  %v60 = vld [vmem:[%s0 + $0xdc] sm:$0xff]
  %v61 = vld [vmem:[%s0 + $0xe4] sm:$0xff]
  %v62 = vld [vmem:[%s0 + $0xec] sm:$0xf]
  %v63 = vld [vmem:[%s0 + $0xf0] sm:$0xff]
  %v64 = vld [vmem:[%s0 + $0xf8] sm:$0xff]
  %v65 = vld [vmem:[%s0 + $0x100] sm:$0xf]
  %v66 = vld [vmem:[%s0 + $0x104] sm:$0xff]
  %v67 = vld [vmem:[%s0 + $0x10c] sm:$0xff]
  %v68 = vld [vmem:[%s0 + $0x114] sm:$0xf]
  %v69 = vld [vmem:[%s0 + $0x118] sm:$0xff]
  %v70 = vld [vmem:[%s0 + $0x120] sm:$0xff]
  %v71 = vld [vmem:[%s0 + $0x128] sm:$0xf]
  %v72 = vld [vmem:[%s0 + $0x12c] sm:$0xff]
  %v73 = vld [vmem:[%s0 + $0x134] sm:$0xff]
  %v74 = vld [vmem:[%s0 + $0x13c] sm:$0xf]
  %v75 = vld [vmem:[%s0 + $0x140] sm:$0xff]
  %v76 = vld [vmem:[%s0 + $0x148] sm:$0xff]
  %v77 = vld [vmem:[%s0 + $0x150] sm:$0xf]
  %v78 = vld [vmem:[%s0 + $0x154] sm:$0xff]
  %v79 = vld [vmem:[%s0 + $0x15c] sm:$0xff]
  %v80 = vld [vmem:[%s0 + $0x164] sm:$0xf]
  %v81 = vld [vmem:[%s0 + $0x168] sm:$0xff]
  %v82 = vld [vmem:[%s0 + $0x170] sm:$0xff]
  %v83 = vld [vmem:[%s0 + $0x178] sm:$0xf]
  %v84 = vld [vmem:[%s0 + $0x17c] sm:$0xff]
  %v85 = vld [vmem:[%s0 + $0x184] sm:$0xff]
  %v86 = vld [vmem:[%s0 + $0x18c] sm:$0xf]
  %v87 = vld [vmem:[%s0 + $0x190] sm:$0xff]
  %v88 = vld [vmem:[%s0 + $0x198] sm:$0xff]
  %v89 = vld [vmem:[%s0 + $0x1a0] sm:$0xf]
  %v90 = vld [vmem:[%s0 + $0x1a4] sm:$0xff]
  %v91 = vld [vmem:[%s0 + $0x1ac] sm:$0xff]
  %v92 = vld [vmem:[%s0 + $0x1b4] sm:$0xf]
  %v93 = vld [vmem:[%s0 + $0x1b8] sm:$0xff]
  %v94 = vld [vmem:[%s0 + $0x1c0] sm:$0xff]
  %v95 = vld [vmem:[%s0 + $0x1c8] sm:$0xf]
  %v96 = vld [vmem:[%s0 + $0x1cc] sm:$0xff]
  %v97 = vld [vmem:[%s0 + $0x1d4] sm:$0xff]
  %v98 = vld [vmem:[%s0 + $0x1dc] sm:$0xf]
  %v99 = vld [vmem:[%s0 + $0x1e0] sm:$0xff]
  %v100 = vld [vmem:[%s0 + $0x1e8] sm:$0xff]
  %v101 = vld [vmem:[%s0 + $0x1f0] sm:$0xf]
  %v102 = vld [vmem:[%s0 + $0x1f4] sm:$0xff]
  %v103 = vld [vmem:[%s0 + $0x1fc] sm:$0xff]
  %v104 = vld [vmem:[%s0 + $0x204] sm:$0xf]
  %v105 = vld [vmem:[%s0 + $0x208] sm:$0xff]
  %v106 = vld [vmem:[%s0 + $0x210] sm:$0xff]
  %v107 = vld [vmem:[%s0 + $0x218] sm:$0xf]
  %v108 = vld [vmem:[%s0 + $0x21c] sm:$0xff]
  %v109 = vld [vmem:[%s0 + $0x224] sm:$0xff]
  %v110 = vld [vmem:[%s0 + $0x22c] sm:$0xf]
  %v111 = vld [vmem:[%s0 + $0x230] sm:$0xff]
  %v112 = vld [vmem:[%s0 + $0x238] sm:$0xff]
  %v113 = vld [vmem:[%s0 + $0x240] sm:$0xf]
  %v114 = vld [vmem:[%s0 + $0x244] sm:$0xff]
  %v115 = vld [vmem:[%s0 + $0x24c] sm:$0xff]
  %v116 = vld [vmem:[%s0 + $0x254] sm:$0xf]
  %v117 = vld [vmem:[%s0 + $0x258] sm:$0xff]
  %v118 = vld [vmem:[%s0 + $0x260] sm:$0xff]
  %v119 = vld [vmem:[%s0 + $0x268] sm:$0xf]
  %v120 = vld [vmem:[%s0 + $0x26c] sm:$0xff]
  %v121 = vld [vmem:[%s0 + $0x274] sm:$0xff]
  %v122 = vld [vmem:[%s0 + $0x27c] sm:$0xf]
  %v123 = vld [vmem:[%s0 + $0x280] sm:$0xff]
  %v124 = vld [vmem:[%s0 + $0x288] sm:$0xff]
  %v125 = vld [vmem:[%s0 + $0x290] sm:$0xf]
  %v126 = vld [vmem:[%s0 + $0x294] sm:$0xff]
  %v127 = vld [vmem:[%s0 + $0x29c] sm:$0xff]
  %v128 = vld [vmem:[%s0 + $0x2a4] sm:$0xf]
  %v129 = vld [vmem:[%s0 + $0x2a8] sm:$0xff]
  %v130 = vld [vmem:[%s0 + $0x2b0] sm:$0xff]
  %v131 = vld [vmem:[%s0 + $0x2b8] sm:$0xf]
  %v132 = vld [vmem:[%s0 + $0x2bc] sm:$0xff]
  %v133 = vld [vmem:[%s0 + $0x2c4] sm:$0xff]
  %v134 = vld [vmem:[%s0 + $0x2cc] sm:$0xf]
  %v135 = vld [vmem:[%s0 + $0x2d0] sm:$0xff]
  %v136 = vld [vmem:[%s0 + $0x2d8] sm:$0xff]
  %v137 = vld [vmem:[%s0 + $0x2e0] sm:$0xf]
  %v138 = vld [vmem:[%s0 + $0x2e4] sm:$0xff]
  %v139 = vld [vmem:[%s0 + $0x2ec] sm:$0xff]
  %v140 = vld [vmem:[%s0 + $0x2f4] sm:$0xf]
  %v141 = vld [vmem:[%s0 + $0x2f8] sm:$0xff]
  %v142 = vld [vmem:[%s0 + $0x300] sm:$0xff]
  %v143 = vld [vmem:[%s0 + $0x308] sm:$0xf]
  %v144 = vld [vmem:[%s0 + $0x30c] sm:$0xff]
  %v145 = vld [vmem:[%s0 + $0x314] sm:$0xff]
  %v146 = vld [vmem:[%s0 + $0x31c] sm:$0xf]
  %v147 = vld [vmem:[%s0 + $0x320] sm:$0xff]
  %v148 = vld [vmem:[%s0 + $0x328] sm:$0xff]
  %v149 = vld [vmem:[%s0 + $0x330] sm:$0xf]
  %v150 = vld [vmem:[%s0 + $0x334] sm:$0xff]
  %v151 = vld [vmem:[%s0 + $0x33c] sm:$0xff]
  %v152 = vld [vmem:[%s0 + $0x344] sm:$0xf]
  %v153 = vld [vmem:[%s0 + $0x348] sm:$0xff]
  %v154 = vld [vmem:[%s0 + $0x350] sm:$0xff]
  %v155 = vld [vmem:[%s0 + $0x358] sm:$0xf]
  %v156 = vld [vmem:[%s0 + $0x35c] sm:$0xff]
  %v157 = vld [vmem:[%s0 + $0x364] sm:$0xff]
  %v158 = vld [vmem:[%s0 + $0x36c] sm:$0xf]
  %v159 = vld [vmem:[%s0 + $0x370] sm:$0xff]
  %v160 = vld [vmem:[%s0 + $0x378] sm:$0xff]
  %v161 = vld [vmem:[%s0 + $0x380] sm:$0xf]
  %v162 = vld [vmem:[%s0 + $0x384] sm:$0xff]
  %v163 = vld [vmem:[%s0 + $0x38c] sm:$0xff]
  %v164 = vld [vmem:[%s0 + $0x394] sm:$0xf]
  %v165 = vld [vmem:[%s0 + $0x398] sm:$0xff]
  %v166 = vld [vmem:[%s0 + $0x3a0] sm:$0xff]
  %v167 = vld [vmem:[%s0 + $0x3a8] sm:$0xf]
  %v168 = vld [vmem:[%s0 + $0x3ac] sm:$0xff]
  %v169 = vld [vmem:[%s0 + $0x3b4] sm:$0xff]
  %v170 = vld [vmem:[%s0 + $0x3bc] sm:$0xf]
  %v171 = vld [vmem:[%s0 + $0x3c0] sm:$0xff]
  %v172 = vld [vmem:[%s0 + $0x3c8] sm:$0xff]
  %v173 = vld [vmem:[%s0 + $0x3d0] sm:$0xf]
  %v174 = vld [vmem:[%s0 + $0x3d4] sm:$0xff]
  %v175 = vld [vmem:[%s0 + $0x3dc] sm:$0xff]
  %v176 = vld [vmem:[%s0 + $0x3e4] sm:$0xf]
  %v177 = vld [vmem:[%s0 + $0x3e8] sm:$0xff]
  %v178 = vld [vmem:[%s0 + $0x3f0] sm:$0xff]
  %v179 = vld [vmem:[%s0 + $0x3f8] sm:$0xf]
  %v180 = vld [vmem:[%s0 + $0x3fc] sm:$0xff]
  %v181 = vld [vmem:[%s0 + $0x404] sm:$0xff]
  %v182 = vld [vmem:[%s0 + $0x40c] sm:$0xf]
  %v183 = vld [vmem:[%s0 + $0x410] sm:$0xff]
  %v184 = vld [vmem:[%s0 + $0x418] sm:$0xff]
  %v185 = vld [vmem:[%s0 + $0x420] sm:$0xf]
  %v186 = vld [vmem:[%s0 + $0x424] sm:$0xff]
  %v187 = vld [vmem:[%s0 + $0x42c] sm:$0xff]
  %v188 = vld [vmem:[%s0 + $0x434] sm:$0xf]
  %v189 = vld [vmem:[%s0 + $0x438] sm:$0xff]
  %v190 = vld [vmem:[%s0 + $0x440] sm:$0xff]
  %v191 = vld [vmem:[%s0 + $0x448] sm:$0xf]
  %v192 = vld [vmem:[%s0 + $0x44c] sm:$0xff]
  %v193 = vld [vmem:[%s0 + $0x454] sm:$0xff]
  %v194 = vld [vmem:[%s0 + $0x45c] sm:$0xf]
  %v195 = vld [vmem:[%s0 + $0x460] sm:$0xff]
  %v196 = vld [vmem:[%s0 + $0x468] sm:$0xff]
  %v197 = vld [vmem:[%s0 + $0x470] sm:$0xf]
  %v198 = vld [vmem:[%s0 + $0x474] sm:$0xff]
  %v199 = vld [vmem:[%s0 + $0x47c] sm:$0xff]
  %v200 = vld [vmem:[%s0 + $0x484] sm:$0xf]
  %v201 = vld [vmem:[%s0 + $0x488] sm:$0xff]
  %v202 = vld [vmem:[%s0 + $0x490] sm:$0xff]
  %v203 = vld [vmem:[%s0 + $0x498] sm:$0xf]
  %v204 = vld [vmem:[%s0 + $0x49c] sm:$0xff]
  %v205 = vld [vmem:[%s0 + $0x4a4] sm:$0xff]
  %v206 = vld [vmem:[%s0 + $0x4ac] sm:$0xf]
  %v207 = vld [vmem:[%s0 + $0x4b0] sm:$0xff]
  %v208 = vld [vmem:[%s0 + $0x4b8] sm:$0xff]
  %v209 = vld [vmem:[%s0 + $0x4c0] sm:$0xf]
  %v210 = vld [vmem:[%s0 + $0x4c4] sm:$0xff]
  %v211 = vld [vmem:[%s0 + $0x4cc] sm:$0xff]
  %v212 = vld [vmem:[%s0 + $0x4d4] sm:$0xf]
  %v213 = vld [vmem:[%s0 + $0x4d8] sm:$0xff]
  %v214 = vld [vmem:[%s0 + $0x4e0] sm:$0xff]
  %v215 = vld [vmem:[%s0 + $0x4e8] sm:$0xf]
  %v216 = vld [vmem:[%s0 + $0x4ec] sm:$0xff]
  %v217 = vld [vmem:[%s0 + $0x4f4] sm:$0xff]
  %v218 = vld [vmem:[%s0 + $0x4fc] sm:$0xf]
  %v219 = vunpack.c.l.bf16 %v27
  %v220 = vunpack.c.h.bf16 %v27
  %v221 = vunpack.c.l.bf16 %v28
  %v222 = vunpack.c.h.bf16 %v28
  %v223 = vunpack.c.l.bf16 %v29
  %v224 = vunpack.c.l.bf16 %v30
  %v225 = vunpack.c.h.bf16 %v30
  %v226 = vunpack.c.l.bf16 %v31
  %v227 = vunpack.c.h.bf16 %v31
  %v228 = vunpack.c.l.bf16 %v32
  %v229 = vunpack.c.l.bf16 %v33
  %v230 = vunpack.c.h.bf16 %v33
  %v231 = vunpack.c.l.bf16 %v34
  %v232 = vunpack.c.h.bf16 %v34
  %v233 = vunpack.c.l.bf16 %v35
  %v234 = vunpack.c.l.bf16 %v36
  %v235 = vunpack.c.h.bf16 %v36
  %v236 = vunpack.c.l.bf16 %v37
  %v237 = vunpack.c.h.bf16 %v37
  %v238 = vunpack.c.l.bf16 %v38
  %v239 = vunpack.c.l.bf16 %v39
  %v240 = vunpack.c.h.bf16 %v39
  %v241 = vunpack.c.l.bf16 %v40
  %v242 = vunpack.c.h.bf16 %v40
  %v243 = vunpack.c.l.bf16 %v41
  %v244 = vunpack.c.l.bf16 %v42
  %v245 = vunpack.c.h.bf16 %v42
  %v246 = vunpack.c.l.bf16 %v43
  %v247 = vunpack.c.h.bf16 %v43
  %v248 = vunpack.c.l.bf16 %v44
  %v249 = vunpack.c.l.bf16 %v45
  %v250 = vunpack.c.h.bf16 %v45
  %v251 = vunpack.c.l.bf16 %v46
  %v252 = vunpack.c.h.bf16 %v46
  %v253 = vunpack.c.l.bf16 %v47
  %v254 = vunpack.c.l.bf16 %v48
  %v255 = vunpack.c.h.bf16 %v48
  %v256 = vunpack.c.l.bf16 %v49
  %v257 = vunpack.c.h.bf16 %v49
  %v258 = vunpack.c.l.bf16 %v50
  %v259 = vunpack.c.l.bf16 %v51
  %v260 = vunpack.c.h.bf16 %v51
  %v261 = vunpack.c.l.bf16 %v52
  %v262 = vunpack.c.h.bf16 %v52
  %v263 = vunpack.c.l.bf16 %v53
  %v264 = vunpack.c.l.bf16 %v54
  %v265 = vunpack.c.h.bf16 %v54
  %v266 = vunpack.c.l.bf16 %v55
  %v267 = vunpack.c.h.bf16 %v55
  %v268 = vunpack.c.l.bf16 %v56
  %v269 = vunpack.c.l.bf16 %v57
  %v270 = vunpack.c.h.bf16 %v57
  %v271 = vunpack.c.l.bf16 %v58
  %v272 = vunpack.c.h.bf16 %v58
  %v273 = vunpack.c.l.bf16 %v59
  %v274 = vunpack.c.l.bf16 %v60
  %v275 = vunpack.c.h.bf16 %v60
  %v276 = vunpack.c.l.bf16 %v61
  %v277 = vunpack.c.h.bf16 %v61
  %v278 = vunpack.c.l.bf16 %v62
  %v279 = vunpack.c.l.bf16 %v63
  %v280 = vunpack.c.h.bf16 %v63
  %v281 = vunpack.c.l.bf16 %v64
  %v282 = vunpack.c.h.bf16 %v64
  %v283 = vunpack.c.l.bf16 %v65
  %v284 = vunpack.c.l.bf16 %v66
  %v285 = vunpack.c.h.bf16 %v66
  %v286 = vunpack.c.l.bf16 %v67
  %v287 = vunpack.c.h.bf16 %v67
  %v288 = vunpack.c.l.bf16 %v68
  %v289 = vunpack.c.l.bf16 %v69
  %v290 = vunpack.c.h.bf16 %v69
  %v291 = vunpack.c.l.bf16 %v70
  %v292 = vunpack.c.h.bf16 %v70
  %v293 = vunpack.c.l.bf16 %v71
  %v294 = vunpack.c.l.bf16 %v72
  %v295 = vunpack.c.h.bf16 %v72
  %v296 = vunpack.c.l.bf16 %v73
  %v297 = vunpack.c.h.bf16 %v73
  %v298 = vunpack.c.l.bf16 %v74
  %v299 = vunpack.c.l.bf16 %v75
  %v300 = vunpack.c.h.bf16 %v75
  %v301 = vunpack.c.l.bf16 %v76
  %v302 = vunpack.c.h.bf16 %v76
  %v303 = vunpack.c.l.bf16 %v77
  %v304 = vunpack.c.l.bf16 %v78
  %v305 = vunpack.c.h.bf16 %v78
  %v306 = vunpack.c.l.bf16 %v79
  %v307 = vunpack.c.h.bf16 %v79
  %v308 = vunpack.c.l.bf16 %v80
  %v309 = vunpack.c.l.bf16 %v81
  %v310 = vunpack.c.h.bf16 %v81
  %v311 = vunpack.c.l.bf16 %v82
  %v312 = vunpack.c.h.bf16 %v82
  %v313 = vunpack.c.l.bf16 %v83
  %v314 = vunpack.c.l.bf16 %v84
  %v315 = vunpack.c.h.bf16 %v84
  %v316 = vunpack.c.l.bf16 %v85
  %v317 = vunpack.c.h.bf16 %v85
  %v318 = vunpack.c.l.bf16 %v86
  %v319 = vunpack.c.l.bf16 %v87
  %v320 = vunpack.c.h.bf16 %v87
  %v321 = vunpack.c.l.bf16 %v88
  %v322 = vunpack.c.h.bf16 %v88
  %v323 = vunpack.c.l.bf16 %v89
  %v324 = vunpack.c.l.bf16 %v90
  %v325 = vunpack.c.h.bf16 %v90
  %v326 = vunpack.c.l.bf16 %v91
  %v327 = vunpack.c.h.bf16 %v91
  %v328 = vunpack.c.l.bf16 %v92
  %v329 = vunpack.c.l.bf16 %v93
  %v330 = vunpack.c.h.bf16 %v93
  %v331 = vunpack.c.l.bf16 %v94
  %v332 = vunpack.c.h.bf16 %v94
  %v333 = vunpack.c.l.bf16 %v95
  %v334 = vunpack.c.l.bf16 %v96
  %v335 = vunpack.c.h.bf16 %v96
  %v336 = vunpack.c.l.bf16 %v97
  %v337 = vunpack.c.h.bf16 %v97
  %v338 = vunpack.c.l.bf16 %v98
  %v339 = vunpack.c.l.bf16 %v99
  %v340 = vunpack.c.h.bf16 %v99
  %v341 = vunpack.c.l.bf16 %v100
  %v342 = vunpack.c.h.bf16 %v100
  %v343 = vunpack.c.l.bf16 %v101
  %v344 = vunpack.c.l.bf16 %v102
  %v345 = vunpack.c.h.bf16 %v102
  %v346 = vunpack.c.l.bf16 %v103
  %v347 = vunpack.c.h.bf16 %v103
  %v348 = vunpack.c.l.bf16 %v104
  %v349 = vunpack.c.l.bf16 %v105
  %v350 = vunpack.c.h.bf16 %v105
  %v351 = vunpack.c.l.bf16 %v106
  %v352 = vunpack.c.h.bf16 %v106
  %v353 = vunpack.c.l.bf16 %v107
  %v354 = vunpack.c.l.bf16 %v108
  %v355 = vunpack.c.h.bf16 %v108
  %v356 = vunpack.c.l.bf16 %v109
  %v357 = vunpack.c.h.bf16 %v109
  %v358 = vunpack.c.l.bf16 %v110
  %v359 = vunpack.c.l.bf16 %v111
  %v360 = vunpack.c.h.bf16 %v111
  %v361 = vunpack.c.l.bf16 %v112
  %v362 = vunpack.c.h.bf16 %v112
  %v363 = vunpack.c.l.bf16 %v113
  %v364 = vunpack.c.l.bf16 %v114
  %v365 = vunpack.c.h.bf16 %v114
  %v366 = vunpack.c.l.bf16 %v115
  %v367 = vunpack.c.h.bf16 %v115
  %v368 = vunpack.c.l.bf16 %v116
  %v369 = vunpack.c.l.bf16 %v117
  %v370 = vunpack.c.h.bf16 %v117
  %v371 = vunpack.c.l.bf16 %v118
  %v372 = vunpack.c.h.bf16 %v118
  %v373 = vunpack.c.l.bf16 %v119
  %v374 = vunpack.c.l.bf16 %v120
  %v375 = vunpack.c.h.bf16 %v120
  %v376 = vunpack.c.l.bf16 %v121
  %v377 = vunpack.c.h.bf16 %v121
  %v378 = vunpack.c.l.bf16 %v122
  %v379 = vunpack.c.l.bf16 %v123
  %v380 = vunpack.c.h.bf16 %v123
  %v381 = vunpack.c.l.bf16 %v124
  %v382 = vunpack.c.h.bf16 %v124
  %v383 = vunpack.c.l.bf16 %v125
  %v384 = vunpack.c.l.bf16 %v126
  %v385 = vunpack.c.h.bf16 %v126
  %v386 = vunpack.c.l.bf16 %v127
  %v387 = vunpack.c.h.bf16 %v127
  %v388 = vunpack.c.l.bf16 %v128
  %v389 = vunpack.c.l.bf16 %v129
  %v390 = vunpack.c.h.bf16 %v129
  %v391 = vunpack.c.l.bf16 %v130
  %v392 = vunpack.c.h.bf16 %v130
  %v393 = vunpack.c.l.bf16 %v131
  %v394 = vunpack.c.l.bf16 %v132
  %v395 = vunpack.c.h.bf16 %v132
  %v396 = vunpack.c.l.bf16 %v133
  %v397 = vunpack.c.h.bf16 %v133
  %v398 = vunpack.c.l.bf16 %v134
  %v399 = vunpack.c.l.bf16 %v135
  %v400 = vunpack.c.h.bf16 %v135
  %v401 = vunpack.c.l.bf16 %v136
  %v402 = vunpack.c.h.bf16 %v136
  %v403 = vunpack.c.l.bf16 %v137
  %v404 = vunpack.c.l.bf16 %v138
  %v405 = vunpack.c.h.bf16 %v138
  %v406 = vunpack.c.l.bf16 %v139
  %v407 = vunpack.c.h.bf16 %v139
  %v408 = vunpack.c.l.bf16 %v140
  %v409 = vunpack.c.l.bf16 %v141
  %v410 = vunpack.c.h.bf16 %v141
  %v411 = vunpack.c.l.bf16 %v142
  %v412 = vunpack.c.h.bf16 %v142
  %v413 = vunpack.c.l.bf16 %v143
  %v414 = vunpack.c.l.bf16 %v144
  %v415 = vunpack.c.h.bf16 %v144
  %v416 = vunpack.c.l.bf16 %v145
  %v417 = vunpack.c.h.bf16 %v145
  %v418 = vunpack.c.l.bf16 %v146
  %v419 = vunpack.c.l.bf16 %v147
  %v420 = vunpack.c.h.bf16 %v147
  %v421 = vunpack.c.l.bf16 %v148
  %v422 = vunpack.c.h.bf16 %v148
  %v423 = vunpack.c.l.bf16 %v149
  %v424 = vunpack.c.l.bf16 %v150
  %v425 = vunpack.c.h.bf16 %v150
  %v426 = vunpack.c.l.bf16 %v151
  %v427 = vunpack.c.h.bf16 %v151
  %v428 = vunpack.c.l.bf16 %v152
  %v429 = vunpack.c.l.bf16 %v153
  %v430 = vunpack.c.h.bf16 %v153
  %v431 = vunpack.c.l.bf16 %v154
  %v432 = vunpack.c.h.bf16 %v154
  %v433 = vunpack.c.l.bf16 %v155
  %v434 = vunpack.c.l.bf16 %v156
  %v435 = vunpack.c.h.bf16 %v156
  %v436 = vunpack.c.l.bf16 %v157
  %v437 = vunpack.c.h.bf16 %v157
  %v438 = vunpack.c.l.bf16 %v158
  %v439 = vunpack.c.l.bf16 %v159
  %v440 = vunpack.c.h.bf16 %v159
  %v441 = vunpack.c.l.bf16 %v160
  %v442 = vunpack.c.h.bf16 %v160
  %v443 = vunpack.c.l.bf16 %v161
  %v444 = vunpack.c.l.bf16 %v162
  %v445 = vunpack.c.h.bf16 %v162
  %v446 = vunpack.c.l.bf16 %v163
  %v447 = vunpack.c.h.bf16 %v163
  %v448 = vunpack.c.l.bf16 %v164
  %v449 = vunpack.c.l.bf16 %v165
  %v450 = vunpack.c.h.bf16 %v165
  %v451 = vunpack.c.l.bf16 %v166
  %v452 = vunpack.c.h.bf16 %v166
  %v453 = vunpack.c.l.bf16 %v167
  %v454 = vunpack.c.l.bf16 %v168
  %v455 = vunpack.c.h.bf16 %v168
  %v456 = vunpack.c.l.bf16 %v169
  %v457 = vunpack.c.h.bf16 %v169
  %v458 = vunpack.c.l.bf16 %v170
  %v459 = vunpack.c.l.bf16 %v171
  %v460 = vunpack.c.h.bf16 %v171
  %v461 = vunpack.c.l.bf16 %v172
  %v462 = vunpack.c.h.bf16 %v172
  %v463 = vunpack.c.l.bf16 %v173
  %v464 = vunpack.c.l.bf16 %v174
  %v465 = vunpack.c.h.bf16 %v174
  %v466 = vunpack.c.l.bf16 %v175
  %v467 = vunpack.c.h.bf16 %v175
  %v468 = vunpack.c.l.bf16 %v176
  %v469 = vunpack.c.l.bf16 %v177
  %v470 = vunpack.c.h.bf16 %v177
  %v471 = vunpack.c.l.bf16 %v178
  %v472 = vunpack.c.h.bf16 %v178
  %v473 = vunpack.c.l.bf16 %v179
  %v474 = vunpack.c.l.bf16 %v180
  %v475 = vunpack.c.h.bf16 %v180
  %v476 = vunpack.c.l.bf16 %v181
  %v477 = vunpack.c.h.bf16 %v181
  %v478 = vunpack.c.l.bf16 %v182
  %v479 = vunpack.c.l.bf16 %v183
  %v480 = vunpack.c.h.bf16 %v183
  %v481 = vunpack.c.l.bf16 %v184
  %v482 = vunpack.c.h.bf16 %v184
  %v483 = vunpack.c.l.bf16 %v185
  %v484 = vunpack.c.l.bf16 %v186
  %v485 = vunpack.c.h.bf16 %v186
  %v486 = vunpack.c.l.bf16 %v187
  %v487 = vunpack.c.h.bf16 %v187
  %v488 = vunpack.c.l.bf16 %v188
  %v489 = vunpack.c.l.bf16 %v189
  %v490 = vunpack.c.h.bf16 %v189
  %v491 = vunpack.c.l.bf16 %v190
  %v492 = vunpack.c.h.bf16 %v190
  %v493 = vunpack.c.l.bf16 %v191
  %v494 = vunpack.c.l.bf16 %v192
  %v495 = vunpack.c.h.bf16 %v192
  %v496 = vunpack.c.l.bf16 %v193
  %v497 = vunpack.c.h.bf16 %v193
  %v498 = vunpack.c.l.bf16 %v194
  %v499 = vunpack.c.l.bf16 %v195
  %v500 = vunpack.c.h.bf16 %v195
  %v501 = vunpack.c.l.bf16 %v196
  %v502 = vunpack.c.h.bf16 %v196
  %v503 = vunpack.c.l.bf16 %v197
  %v504 = vunpack.c.l.bf16 %v198
  %v505 = vunpack.c.h.bf16 %v198
  %v506 = vunpack.c.l.bf16 %v199
  %v507 = vunpack.c.h.bf16 %v199
  %v508 = vunpack.c.l.bf16 %v200
  %v509 = vunpack.c.l.bf16 %v201
  %v510 = vunpack.c.h.bf16 %v201
  %v511 = vunpack.c.l.bf16 %v202
  %v512 = vunpack.c.h.bf16 %v202
  %v513 = vunpack.c.l.bf16 %v203
  %v514 = vunpack.c.l.bf16 %v204
  %v515 = vunpack.c.h.bf16 %v204
  %v516 = vunpack.c.l.bf16 %v205
  %v517 = vunpack.c.h.bf16 %v205
  %v518 = vunpack.c.l.bf16 %v206
  %v519 = vunpack.c.l.bf16 %v207
  %v520 = vunpack.c.h.bf16 %v207
  %v521 = vunpack.c.l.bf16 %v208
  %v522 = vunpack.c.h.bf16 %v208
  %v523 = vunpack.c.l.bf16 %v209
  %v524 = vunpack.c.l.bf16 %v210
  %v525 = vunpack.c.h.bf16 %v210
  %v526 = vunpack.c.l.bf16 %v211
  %v527 = vunpack.c.h.bf16 %v211
  %v528 = vunpack.c.l.bf16 %v212
  %v529 = vunpack.c.l.bf16 %v213
  %v530 = vunpack.c.h.bf16 %v213
  %v531 = vunpack.c.l.bf16 %v214
  %v532 = vunpack.c.h.bf16 %v214
  %v533 = vunpack.c.l.bf16 %v215
  %v534 = vunpack.c.l.bf16 %v216
  %v535 = vunpack.c.h.bf16 %v216
  %v536 = vunpack.c.l.bf16 %v217
  %v537 = vunpack.c.h.bf16 %v217
  %v538 = vunpack.c.l.bf16 %v218
  %v539 = vadd.f32 %v219, %v224
  %v540 = vadd.f32 %v539, %v229
  %v541 = vadd.f32 %v540, %v234
  %v542 = vadd.f32 %v541, %v239
  %v543 = vadd.f32 %v542, %v244
  %v544 = vadd.f32 %v543, %v249
  %v545 = vadd.f32 %v544, %v254
  %v546 = vadd.f32 %v545, %v259
  %v547 = vadd.f32 %v546, %v264
  %v548 = vadd.f32 %v547, %v269
  %v549 = vadd.f32 %v548, %v274
  %v550 = vadd.f32 %v549, %v279
  %v551 = vadd.f32 %v550, %v284
  %v552 = vadd.f32 %v551, %v289
  %v553 = vadd.f32 %v552, %v294
  %v554 = vadd.f32 %v553, %v299
  %v555 = vadd.f32 %v554, %v304
  %v556 = vadd.f32 %v555, %v309
  %v557 = vadd.f32 %v556, %v314
  %v558 = vadd.f32 %v557, %v319
  %v559 = vadd.f32 %v558, %v324
  %v560 = vadd.f32 %v559, %v329
  %v561 = vadd.f32 %v560, %v334
  %v562 = vadd.f32 %v561, %v339
  %v563 = vadd.f32 %v562, %v344
  %v564 = vadd.f32 %v563, %v349
  %v565 = vadd.f32 %v564, %v354
  %v566 = vadd.f32 %v565, %v359
  %v567 = vadd.f32 %v566, %v364
  %v568 = vadd.f32 %v567, %v369
  %v569 = vadd.f32 %v568, %v374
  %v570 = vrot.slane %v569, 4
  %v571 = vadd.f32 %v569, %v570
  %v572 = vrot.slane %v571, 2
  %v573 = vadd.f32 %v571, %v572
  %v574 = vrot.slane %v573, 1
  %v575 = vadd.f32 %v573, %v574
  %v576 = vadd.f32 %v220, %v225
  %v577 = vadd.f32 %v576, %v230
  %v578 = vadd.f32 %v577, %v235
  %v579 = vadd.f32 %v578, %v240
  %v580 = vadd.f32 %v579, %v245
  %v581 = vadd.f32 %v580, %v250
  %v582 = vadd.f32 %v581, %v255
  %v583 = vadd.f32 %v582, %v260
  %v584 = vadd.f32 %v583, %v265
  %v585 = vadd.f32 %v584, %v270
  %v586 = vadd.f32 %v585, %v275
  %v587 = vadd.f32 %v586, %v280
  %v588 = vadd.f32 %v587, %v285
  %v589 = vadd.f32 %v588, %v290
  %v590 = vadd.f32 %v589, %v295
  %v591 = vadd.f32 %v590, %v300
  %v592 = vadd.f32 %v591, %v305
  %v593 = vadd.f32 %v592, %v310
  %v594 = vadd.f32 %v593, %v315
  %v595 = vadd.f32 %v594, %v320
  %v596 = vadd.f32 %v595, %v325
  %v597 = vadd.f32 %v596, %v330
  %v598 = vadd.f32 %v597, %v335
  %v599 = vadd.f32 %v598, %v340
  %v600 = vadd.f32 %v599, %v345
  %v601 = vadd.f32 %v600, %v350
  %v602 = vadd.f32 %v601, %v355
  %v603 = vadd.f32 %v602, %v360
  %v604 = vadd.f32 %v603, %v365
  %v605 = vadd.f32 %v604, %v370
  %v606 = vadd.f32 %v605, %v375
  %v607 = vrot.slane %v606, 4
  %v608 = vadd.f32 %v606, %v607
  %v609 = vrot.slane %v608, 2
  %v610 = vadd.f32 %v608, %v609
  %v611 = vrot.slane %v610, 1
  %v612 = vadd.f32 %v610, %v611
  %v613 = vadd.f32 %v221, %v226
  %v614 = vadd.f32 %v613, %v231
  %v615 = vadd.f32 %v614, %v236
  %v616 = vadd.f32 %v615, %v241
  %v617 = vadd.f32 %v616, %v246
  %v618 = vadd.f32 %v617, %v251
  %v619 = vadd.f32 %v618, %v256
  %v620 = vadd.f32 %v619, %v261
  %v621 = vadd.f32 %v620, %v266
  %v622 = vadd.f32 %v621, %v271
  %v623 = vadd.f32 %v622, %v276
  %v624 = vadd.f32 %v623, %v281
  %v625 = vadd.f32 %v624, %v286
  %v626 = vadd.f32 %v625, %v291
  %v627 = vadd.f32 %v626, %v296
  %v628 = vadd.f32 %v627, %v301
  %v629 = vadd.f32 %v628, %v306
  %v630 = vadd.f32 %v629, %v311
  %v631 = vadd.f32 %v630, %v316
  %v632 = vadd.f32 %v631, %v321
  %v633 = vadd.f32 %v632, %v326
  %v634 = vadd.f32 %v633, %v331
  %v635 = vadd.f32 %v634, %v336
  %v636 = vadd.f32 %v635, %v341
  %v637 = vadd.f32 %v636, %v346
  %v638 = vadd.f32 %v637, %v351
  %v639 = vadd.f32 %v638, %v356
  %v640 = vadd.f32 %v639, %v361
  %v641 = vadd.f32 %v640, %v366
  %v642 = vadd.f32 %v641, %v371
  %v643 = vadd.f32 %v642, %v376
  %v644 = vrot.slane %v643, 4
  %v645 = vadd.f32 %v643, %v644
  %v646 = vrot.slane %v645, 2
  %v647 = vadd.f32 %v645, %v646
  %v648 = vrot.slane %v647, 1
  %v649 = vadd.f32 %v647, %v648
  %v650 = vadd.f32 %v222, %v227
  %v651 = vadd.f32 %v650, %v232
  %v652 = vadd.f32 %v651, %v237
  %v653 = vadd.f32 %v652, %v242
  %v654 = vadd.f32 %v653, %v247
  %v655 = vadd.f32 %v654, %v252
  %v656 = vadd.f32 %v655, %v257
  %v657 = vadd.f32 %v656, %v262
  %v658 = vadd.f32 %v657, %v267
  %v659 = vadd.f32 %v658, %v272
  %v660 = vadd.f32 %v659, %v277
  %v661 = vadd.f32 %v660, %v282
  %v662 = vadd.f32 %v661, %v287
  %v663 = vadd.f32 %v662, %v292
  %v664 = vadd.f32 %v663, %v297
  %v665 = vadd.f32 %v664, %v302
  %v666 = vadd.f32 %v665, %v307
  %v667 = vadd.f32 %v666, %v312
  %v668 = vadd.f32 %v667, %v317
  %v669 = vadd.f32 %v668, %v322
  %v670 = vadd.f32 %v669, %v327
  %v671 = vadd.f32 %v670, %v332
  %v672 = vadd.f32 %v671, %v337
  %v673 = vadd.f32 %v672, %v342
  %v674 = vadd.f32 %v673, %v347
  %v675 = vadd.f32 %v674, %v352
  %v676 = vadd.f32 %v675, %v357
  %v677 = vadd.f32 %v676, %v362
  %v678 = vadd.f32 %v677, %v367
  %v679 = vadd.f32 %v678, %v372
  %v680 = vadd.f32 %v679, %v377
  %v681 = vrot.slane %v680, 4
  %v682 = vadd.f32 %v680, %v681
  %v683 = vrot.slane %v682, 2
  %v684 = vadd.f32 %v682, %v683
  %v685 = vrot.slane %v684, 1
  %v686 = vadd.f32 %v684, %v685
  %v687 = vadd.f32 %v223, %v228
  %v688 = vadd.f32 %v687, %v233
  %v689 = vadd.f32 %v688, %v238
  %v690 = vadd.f32 %v689, %v243
  %v691 = vadd.f32 %v690, %v248
  %v692 = vadd.f32 %v691, %v253
  %v693 = vadd.f32 %v692, %v258
  %v694 = vadd.f32 %v693, %v263
  %v695 = vadd.f32 %v694, %v268
  %v696 = vadd.f32 %v695, %v273
  %v697 = vadd.f32 %v696, %v278
  %v698 = vadd.f32 %v697, %v283
  %v699 = vadd.f32 %v698, %v288
  %v700 = vadd.f32 %v699, %v293
  %v701 = vadd.f32 %v700, %v298
  %v702 = vadd.f32 %v701, %v303
  %v703 = vadd.f32 %v702, %v308
  %v704 = vadd.f32 %v703, %v313
  %v705 = vadd.f32 %v704, %v318
  %v706 = vadd.f32 %v705, %v323
  %v707 = vadd.f32 %v706, %v328
  %v708 = vadd.f32 %v707, %v333
  %v709 = vadd.f32 %v708, %v338
  %v710 = vadd.f32 %v709, %v343
  %v711 = vadd.f32 %v710, %v348
  %v712 = vadd.f32 %v711, %v353
  %v713 = vadd.f32 %v712, %v358
  %v714 = vadd.f32 %v713, %v363
  %v715 = vadd.f32 %v714, %v368
  %v716 = vadd.f32 %v715, %v373
  %v717 = vadd.f32 %v716, %v378
  %v718 = vrot.slane %v717, 4
  %v719 = vadd.f32 %v717, %v718
  %v720 = vrot.slane %v719, 2
  %v721 = vadd.f32 %v719, %v720
  %v722 = vrot.slane %v721, 1
  %v723 = vadd.f32 %v721, %v722
  %v724 = vadd.f32 %v379, %v384
  %v725 = vadd.f32 %v724, %v389
  %v726 = vadd.f32 %v725, %v394
  %v727 = vadd.f32 %v726, %v399
  %v728 = vadd.f32 %v727, %v404
  %v729 = vadd.f32 %v728, %v409
  %v730 = vadd.f32 %v729, %v414
  %v731 = vadd.f32 %v730, %v419
  %v732 = vadd.f32 %v731, %v424
  %v733 = vadd.f32 %v732, %v429
  %v734 = vadd.f32 %v733, %v434
  %v735 = vadd.f32 %v734, %v439
  %v736 = vadd.f32 %v735, %v444
  %v737 = vadd.f32 %v736, %v449
  %v738 = vadd.f32 %v737, %v454
  %v739 = vadd.f32 %v738, %v459
  %v740 = vadd.f32 %v739, %v464
  %v741 = vadd.f32 %v740, %v469
  %v742 = vadd.f32 %v741, %v474
  %v743 = vadd.f32 %v742, %v479
  %v744 = vadd.f32 %v743, %v484
  %v745 = vadd.f32 %v744, %v489
  %v746 = vadd.f32 %v745, %v494
  %v747 = vadd.f32 %v746, %v499
  %v748 = vadd.f32 %v747, %v504
  %v749 = vadd.f32 %v748, %v509
  %v750 = vadd.f32 %v749, %v514
  %v751 = vadd.f32 %v750, %v519
  %v752 = vadd.f32 %v751, %v524
  %v753 = vadd.f32 %v752, %v529
  %v754 = vadd.f32 %v753, %v534
  %v755 = vrot.slane %v754, 4
  %v756 = vadd.f32 %v754, %v755
  %v757 = vrot.slane %v756, 2
  %v758 = vadd.f32 %v756, %v757
  %v759 = vrot.slane %v758, 1
  %v760 = vadd.f32 %v758, %v759
  %v761 = vadd.f32 %v380, %v385
  %v762 = vadd.f32 %v761, %v390
  %v763 = vadd.f32 %v762, %v395
  %v764 = vadd.f32 %v763, %v400
  %v765 = vadd.f32 %v764, %v405
  %v766 = vadd.f32 %v765, %v410
  %v767 = vadd.f32 %v766, %v415
  %v768 = vadd.f32 %v767, %v420
  %v769 = vadd.f32 %v768, %v425
  %v770 = vadd.f32 %v769, %v430
  %v771 = vadd.f32 %v770, %v435
  %v772 = vadd.f32 %v771, %v440
  %v773 = vadd.f32 %v772, %v445
  %v774 = vadd.f32 %v773, %v450
  %v775 = vadd.f32 %v774, %v455
  %v776 = vadd.f32 %v775, %v460
  %v777 = vadd.f32 %v776, %v465
  %v778 = vadd.f32 %v777, %v470
  %v779 = vadd.f32 %v778, %v475
  %v780 = vadd.f32 %v779, %v480
  %v781 = vadd.f32 %v780, %v485
  %v782 = vadd.f32 %v781, %v490
  %v783 = vadd.f32 %v782, %v495
  %v784 = vadd.f32 %v783, %v500
  %v785 = vadd.f32 %v784, %v505
  %v786 = vadd.f32 %v785, %v510
  %v787 = vadd.f32 %v786, %v515
  %v788 = vadd.f32 %v787, %v520
  %v789 = vadd.f32 %v788, %v525
  %v790 = vadd.f32 %v789, %v530
  %v791 = vadd.f32 %v790, %v535
  %v792 = vrot.slane %v791, 4
  %v793 = vadd.f32 %v791, %v792
  %v794 = vrot.slane %v793, 2
  %v795 = vadd.f32 %v793, %v794
  %v796 = vrot.slane %v795, 1
  %v797 = vadd.f32 %v795, %v796
  %v798 = vadd.f32 %v381, %v386
  %v799 = vadd.f32 %v798, %v391
  %v800 = vadd.f32 %v799, %v396
  %v801 = vadd.f32 %v800, %v401
  %v802 = vadd.f32 %v801, %v406
  %v803 = vadd.f32 %v802, %v411
  %v804 = vadd.f32 %v803, %v416
  %v805 = vadd.f32 %v804, %v421
  %v806 = vadd.f32 %v805, %v426
  %v807 = vadd.f32 %v806, %v431
  %v808 = vadd.f32 %v807, %v436
  %v809 = vadd.f32 %v808, %v441
  %v810 = vadd.f32 %v809, %v446
  %v811 = vadd.f32 %v810, %v451
  %v812 = vadd.f32 %v811, %v456
  %v813 = vadd.f32 %v812, %v461
  %v814 = vadd.f32 %v813, %v466
  %v815 = vadd.f32 %v814, %v471
  %v816 = vadd.f32 %v815, %v476
  %v817 = vadd.f32 %v816, %v481
  %v818 = vadd.f32 %v817, %v486
  %v819 = vadd.f32 %v818, %v491
  %v820 = vadd.f32 %v819, %v496
  %v821 = vadd.f32 %v820, %v501
  %v822 = vadd.f32 %v821, %v506
  %v823 = vadd.f32 %v822, %v511
  %v824 = vadd.f32 %v823, %v516
  %v825 = vadd.f32 %v824, %v521
  %v826 = vadd.f32 %v825, %v526
  %v827 = vadd.f32 %v826, %v531
  %v828 = vadd.f32 %v827, %v536
  %v829 = vrot.slane %v828, 4
  %v830 = vadd.f32 %v828, %v829
  %v831 = vrot.slane %v830, 2
  %v832 = vadd.f32 %v830, %v831
  %v833 = vrot.slane %v832, 1
  %v834 = vadd.f32 %v832, %v833
  %v835 = vadd.f32 %v382, %v387
  %v836 = vadd.f32 %v835, %v392
  %v837 = vadd.f32 %v836, %v397
  %v838 = vadd.f32 %v837, %v402
  %v839 = vadd.f32 %v838, %v407
  %v840 = vadd.f32 %v839, %v412
  %v841 = vadd.f32 %v840, %v417
  %v842 = vadd.f32 %v841, %v422
  %v843 = vadd.f32 %v842, %v427
  %v844 = vadd.f32 %v843, %v432
  %v845 = vadd.f32 %v844, %v437
  %v846 = vadd.f32 %v845, %v442
  %v847 = vadd.f32 %v846, %v447
  %v848 = vadd.f32 %v847, %v452
  %v849 = vadd.f32 %v848, %v457
  %v850 = vadd.f32 %v849, %v462
  %v851 = vadd.f32 %v850, %v467
  %v852 = vadd.f32 %v851, %v472
  %v853 = vadd.f32 %v852, %v477
  %v854 = vadd.f32 %v853, %v482
  %v855 = vadd.f32 %v854, %v487
  %v856 = vadd.f32 %v855, %v492
  %v857 = vadd.f32 %v856, %v497
  %v858 = vadd.f32 %v857, %v502
  %v859 = vadd.f32 %v858, %v507
  %v860 = vadd.f32 %v859, %v512
  %v861 = vadd.f32 %v860, %v517
  %v862 = vadd.f32 %v861, %v522
  %v863 = vadd.f32 %v862, %v527
  %v864 = vadd.f32 %v863, %v532
  %v865 = vadd.f32 %v864, %v537
  %v866 = vrot.slane %v865, 4
  %v867 = vadd.f32 %v865, %v866
  %v868 = vrot.slane %v867, 2
  %v869 = vadd.f32 %v867, %v868
  %v870 = vrot.slane %v869, 1
  %v871 = vadd.f32 %v869, %v870
  %v872 = vadd.f32 %v383, %v388
  %v873 = vadd.f32 %v872, %v393
  %v874 = vadd.f32 %v873, %v398
  %v875 = vadd.f32 %v874, %v403
  %v876 = vadd.f32 %v875, %v408
  %v877 = vadd.f32 %v876, %v413
  %v878 = vadd.f32 %v877, %v418
  %v879 = vadd.f32 %v878, %v423
  %v880 = vadd.f32 %v879, %v428
  %v881 = vadd.f32 %v880, %v433
  %v882 = vadd.f32 %v881, %v438
  %v883 = vadd.f32 %v882, %v443
  %v884 = vadd.f32 %v883, %v448
  %v885 = vadd.f32 %v884, %v453
  %v886 = vadd.f32 %v885, %v458
  %v887 = vadd.f32 %v886, %v463
  %v888 = vadd.f32 %v887, %v468
  %v889 = vadd.f32 %v888, %v473
  %v890 = vadd.f32 %v889, %v478
  %v891 = vadd.f32 %v890, %v483
  %v892 = vadd.f32 %v891, %v488
  %v893 = vadd.f32 %v892, %v493
  %v894 = vadd.f32 %v893, %v498
  %v895 = vadd.f32 %v894, %v503
  %v896 = vadd.f32 %v895, %v508
  %v897 = vadd.f32 %v896, %v513
  %v898 = vadd.f32 %v897, %v518
  %v899 = vadd.f32 %v898, %v523
  %v900 = vadd.f32 %v899, %v528
  %v901 = vadd.f32 %v900, %v533
  %v902 = vadd.f32 %v901, %v538
  %v903 = vrot.slane %v902, 4
  %v904 = vadd.f32 %v902, %v903
  %v905 = vrot.slane %v904, 2
  %v906 = vadd.f32 %v904, %v905
  %v907 = vrot.slane %v906, 1
  %v908 = vadd.f32 %v906, %v907
  %v909 = vrcp.pop 256.0
  %v910 = vmul.f32 %v575, %v909
  %v911 = vmul.f32 %v612, %v909
  %v912 = vmul.f32 %v649, %v909
  %v913 = vmul.f32 %v686, %v909
  %v914 = vmul.f32 %v723, %v909
  %v915 = vmul.f32 %v760, %v909
  %v916 = vmul.f32 %v797, %v909
  %v917 = vmul.f32 %v834, %v909
  %v918 = vmul.f32 %v871, %v909
  %v919 = vmul.f32 %v908, %v909
  %v920 = vpack.c.bf16 %v910, %v910
  %v921 = vpack.c.bf16 %v911, %v911
  %v922 = vpack.c.bf16 %v912, %v912
  %v923 = vpack.c.bf16 %v913, %v913
  %v924 = vpack.c.bf16 %v914, %v914
  %v925 = vpack.c.bf16 %v915, %v915
  %v926 = vpack.c.bf16 %v916, %v916
  %v927 = vpack.c.bf16 %v917, %v917
  %v928 = vpack.c.bf16 %v918, %v918
  %v929 = vpack.c.bf16 %v919, %v919
  %v930 = vld [vmem:[%s2] sm:$0xf]
  %v931 = vld [vmem:[%s2 + $0x4] sm:$0xf]
  %v932 = vld [vmem:[%s2 + $0x8] sm:$0xf]
  %v933 = vld [vmem:[%s2 + $0xc] sm:$0xf]
  %v934 = vld [vmem:[%s2 + $0x10] sm:$0xf]
  %v935 = vld [vmem:[%s2 + $0x14] sm:$0xf]
  %v936 = vld [vmem:[%s2 + $0x18] sm:$0xf]
  %v937 = vld [vmem:[%s2 + $0x1c] sm:$0xf]
  %v938 = vld [vmem:[%s2 + $0x20] sm:$0xf]
  %v939 = vld [vmem:[%s2 + $0x24] sm:$0xf]
  %v940 = vld [vmem:[%s2 + $0x28] sm:$0xf]
  %v941 = vld [vmem:[%s2 + $0x2c] sm:$0xf]
  %v942 = vld [vmem:[%s2 + $0x30] sm:$0xf]
  %v943 = vld [vmem:[%s2 + $0x34] sm:$0xf]
  %v944 = vld [vmem:[%s2 + $0x38] sm:$0xf]
  %v945 = vld [vmem:[%s2 + $0x3c] sm:$0xf]
  %v946 = vld [vmem:[%s2 + $0x40] sm:$0xf]
  %v947 = vld [vmem:[%s2 + $0x44] sm:$0xf]
  %v948 = vld [vmem:[%s2 + $0x48] sm:$0xf]
  %v949 = vld [vmem:[%s2 + $0x4c] sm:$0xf]
  %v950 = vld [vmem:[%s2 + $0x50] sm:$0xf]
  %v951 = vld [vmem:[%s2 + $0x54] sm:$0xf]
  %v952 = vld [vmem:[%s2 + $0x58] sm:$0xf]
  %v953 = vld [vmem:[%s2 + $0x5c] sm:$0xf]
  %v954 = vld [vmem:[%s2 + $0x60] sm:$0xf]
  %v955 = vld [vmem:[%s2 + $0x64] sm:$0xf]
  %v956 = vld [vmem:[%s2 + $0x68] sm:$0xf]
  %v957 = vld [vmem:[%s2 + $0x6c] sm:$0xf]
  %v958 = vld [vmem:[%s2 + $0x70] sm:$0xf]
  %v959 = vld [vmem:[%s2 + $0x74] sm:$0xf]
  %v960 = vld [vmem:[%s2 + $0x78] sm:$0xf]
  %v961 = vld [vmem:[%s2 + $0x7c] sm:$0xf]
  %v962 = vld [vmem:[%s2 + $0x80] sm:$0xf]
  %v963 = vld [vmem:[%s2 + $0x84] sm:$0xf]
  %v964 = vld [vmem:[%s2 + $0x88] sm:$0xf]
  %v965 = vld [vmem:[%s2 + $0x8c] sm:$0xf]
  %v966 = vld [vmem:[%s2 + $0x90] sm:$0xf]
  %v967 = vld [vmem:[%s2 + $0x94] sm:$0xf]
  %v968 = vld [vmem:[%s2 + $0x98] sm:$0xf]
  %v969 = vld [vmem:[%s2 + $0x9c] sm:$0xf]
  %v970 = vld [vmem:[%s2 + $0xa0] sm:$0xf]
  %v971 = vld [vmem:[%s2 + $0xa4] sm:$0xf]
  %v972 = vld [vmem:[%s2 + $0xa8] sm:$0xf]
  %v973 = vld [vmem:[%s2 + $0xac] sm:$0xf]
  %v974 = vld [vmem:[%s2 + $0xb0] sm:$0xf]
  %v975 = vld [vmem:[%s2 + $0xb4] sm:$0xf]
  %v976 = vld [vmem:[%s2 + $0xb8] sm:$0xf]
  %v977 = vld [vmem:[%s2 + $0xbc] sm:$0xf]
  %v978 = vld [vmem:[%s2 + $0xc0] sm:$0xf]
  %v979 = vld [vmem:[%s2 + $0xc4] sm:$0xf]
  %v980 = vld [vmem:[%s2 + $0xc8] sm:$0xf]
  %v981 = vld [vmem:[%s2 + $0xcc] sm:$0xf]
  %v982 = vld [vmem:[%s2 + $0xd0] sm:$0xf]
  %v983 = vld [vmem:[%s2 + $0xd4] sm:$0xf]
  %v984 = vld [vmem:[%s2 + $0xd8] sm:$0xf]
  %v985 = vld [vmem:[%s2 + $0xdc] sm:$0xf]
  %v986 = vld [vmem:[%s2 + $0xe0] sm:$0xf]
  %v987 = vld [vmem:[%s2 + $0xe4] sm:$0xf]
  %v988 = vld [vmem:[%s2 + $0xe8] sm:$0xf]
  %v989 = vld [vmem:[%s2 + $0xec] sm:$0xf]
  %v990 = vld [vmem:[%s2 + $0xf0] sm:$0xf]
  %v991 = vld [vmem:[%s2 + $0xf4] sm:$0xf]
  %v992 = vld [vmem:[%s2 + $0xf8] sm:$0xf]
  %v993 = vld [vmem:[%s2 + $0xfc] sm:$0xf]
  %v994 = vld [vmem:[%s2 + $0x100] sm:$0xf]
  %v995 = vld [vmem:[%s2 + $0x104] sm:$0xf]
  %v996 = vld [vmem:[%s2 + $0x108] sm:$0xf]
  %v997 = vld [vmem:[%s2 + $0x10c] sm:$0xf]
  %v998 = vld [vmem:[%s2 + $0x110] sm:$0xf]
  %v999 = vld [vmem:[%s2 + $0x114] sm:$0xf]
  %v1000 = vld [vmem:[%s2 + $0x118] sm:$0xf]
  %v1001 = vld [vmem:[%s2 + $0x11c] sm:$0xf]
  %v1002 = vld [vmem:[%s2 + $0x120] sm:$0xf]
  %v1003 = vld [vmem:[%s2 + $0x124] sm:$0xf]
  %v1004 = vld [vmem:[%s2 + $0x128] sm:$0xf]
  %v1005 = vld [vmem:[%s2 + $0x12c] sm:$0xf]
  %v1006 = vld [vmem:[%s2 + $0x130] sm:$0xf]
  %v1007 = vld [vmem:[%s2 + $0x134] sm:$0xf]
  %v1008 = vld [vmem:[%s2 + $0x138] sm:$0xf]
  %v1009 = vld [vmem:[%s2 + $0x13c] sm:$0xf]
  %v1010 = vld [vmem:[%s3] sm:$0x1]
  %v1012 = vlaneseq
  %v1013 = vshrl.u32 %v1012, 7
  %v1014 = vsub.s32 0, %v1013
  %v1015 = vrot.slane %v1010, %v1014
  %v1027 = vunpack.c.l.b16 %v920
  %v1028 = vunpack.c.l.b16 %v921
  %v1029 = vunpack.c.l.b16 %v922
  %v1030 = vunpack.c.l.b16 %v923
  %v1031 = vunpack.c.l.b16 %v924
  %v1032 = vunpack.c.l.b16 %v925
  %v1033 = vunpack.c.l.b16 %v926
  %v1034 = vunpack.c.l.b16 %v927
  %v1035 = vunpack.c.l.b16 %v928
  %v1036 = vunpack.c.l.b16 %v929
  %vm1037 = vcmask 1041409
  %v1038 = vsel %vm1037, %v1032, %v1027
  %v1039 = vsel %vm1037, %v1033, %v1028
  %v1040 = vsel %vm1037, %v1034, %v1029
  %v1041 = vsel %vm1037, %v1035, %v1030
  %v1042 = vsel %vm1037, %v1036, %v1031
  %v1043 = vpack.c.b16 %v1038, %v1038
  %v1044 = vpack.c.b16 %v1039, %v1039
  %v1045 = vpack.c.b16 %v1040, %v1040
  %v1046 = vpack.c.b16 %v1041, %v1041
  %v1047 = vpack.c.b16 %v1042, %v1042
  %v1133 = vunpack.c.l.b16 %v930
  %v1134 = vunpack.c.l.b16 %v931
  %v1135 = vunpack.c.l.b16 %v932
  %v1136 = vunpack.c.l.b16 %v933
  %v1137 = vunpack.c.l.b16 %v934
  %v1138 = vunpack.c.l.b16 %v935
  %v1139 = vunpack.c.l.b16 %v936
  %v1140 = vunpack.c.l.b16 %v937
  %v1141 = vunpack.c.l.b16 %v938
  %v1142 = vunpack.c.l.b16 %v939
  %v1143 = vunpack.c.l.b16 %v940
  %v1144 = vunpack.c.l.b16 %v941
  %v1145 = vunpack.c.l.b16 %v942
  %v1146 = vunpack.c.l.b16 %v943
  %v1147 = vunpack.c.l.b16 %v944
  %v1148 = vunpack.c.l.b16 %v945
  %v1149 = vunpack.c.l.b16 %v946
  %v1150 = vunpack.c.l.b16 %v947
  %v1151 = vunpack.c.l.b16 %v948
  %v1152 = vunpack.c.l.b16 %v949
  %v1153 = vunpack.c.l.b16 %v950
  %v1154 = vunpack.c.l.b16 %v951
  %v1155 = vunpack.c.l.b16 %v952
  %v1156 = vunpack.c.l.b16 %v953
  %v1157 = vunpack.c.l.b16 %v954
  %v1158 = vunpack.c.l.b16 %v955
  %v1159 = vunpack.c.l.b16 %v956
  %v1160 = vunpack.c.l.b16 %v957
  %v1161 = vunpack.c.l.b16 %v958
  %v1162 = vunpack.c.l.b16 %v959
  %v1163 = vunpack.c.l.b16 %v960
  %v1164 = vunpack.c.l.b16 %v961
  %v1165 = vunpack.c.l.b16 %v962
  %v1166 = vunpack.c.l.b16 %v963
  %v1167 = vunpack.c.l.b16 %v964
  %v1168 = vunpack.c.l.b16 %v965
  %v1169 = vunpack.c.l.b16 %v966
  %v1170 = vunpack.c.l.b16 %v967
  %v1171 = vunpack.c.l.b16 %v968
  %v1172 = vunpack.c.l.b16 %v969
  %v1173 = vunpack.c.l.b16 %v970
  %v1174 = vunpack.c.l.b16 %v971
  %v1175 = vunpack.c.l.b16 %v972
  %v1176 = vunpack.c.l.b16 %v973
  %v1177 = vunpack.c.l.b16 %v974
  %v1178 = vunpack.c.l.b16 %v975
  %v1179 = vunpack.c.l.b16 %v976
  %v1180 = vunpack.c.l.b16 %v977
  %v1181 = vunpack.c.l.b16 %v978
  %v1182 = vunpack.c.l.b16 %v979
  %v1183 = vunpack.c.l.b16 %v980
  %v1184 = vunpack.c.l.b16 %v981
  %v1185 = vunpack.c.l.b16 %v982
  %v1186 = vunpack.c.l.b16 %v983
  %v1187 = vunpack.c.l.b16 %v984
  %v1188 = vunpack.c.l.b16 %v985
  %v1189 = vunpack.c.l.b16 %v986
  %v1190 = vunpack.c.l.b16 %v987
  %v1191 = vunpack.c.l.b16 %v988
  %v1192 = vunpack.c.l.b16 %v989
  %v1193 = vunpack.c.l.b16 %v990
  %v1194 = vunpack.c.l.b16 %v991
  %v1195 = vunpack.c.l.b16 %v992
  %v1196 = vunpack.c.l.b16 %v993
  %v1197 = vunpack.c.l.b16 %v994
  %v1198 = vunpack.c.l.b16 %v995
  %v1199 = vunpack.c.l.b16 %v996
  %v1200 = vunpack.c.l.b16 %v997
  %v1201 = vunpack.c.l.b16 %v998
  %v1202 = vunpack.c.l.b16 %v999
  %v1203 = vunpack.c.l.b16 %v1000
  %v1204 = vunpack.c.l.b16 %v1001
  %v1205 = vunpack.c.l.b16 %v1002
  %v1206 = vunpack.c.l.b16 %v1003
  %v1207 = vunpack.c.l.b16 %v1004
  %v1208 = vunpack.c.l.b16 %v1005
  %v1209 = vunpack.c.l.b16 %v1006
  %v1210 = vunpack.c.l.b16 %v1007
  %v1211 = vunpack.c.l.b16 %v1008
  %v1212 = vunpack.c.l.b16 %v1009
  %v1213 = vpack.c.b16 %v1134, %v1133
  %v1214 = vpack.c.b16 %v1136, %v1135
  %v1215 = vpack.c.b16 %v1138, %v1137
  %v1216 = vpack.c.b16 %v1140, %v1139
  %v1217 = vpack.c.b16 %v1142, %v1141
  %v1218 = vpack.c.b16 %v1144, %v1143
  %v1219 = vpack.c.b16 %v1146, %v1145
  %v1220 = vpack.c.b16 %v1148, %v1147
  %v1221 = vpack.c.b16 %v1150, %v1149
  %v1222 = vpack.c.b16 %v1152, %v1151
  %v1223 = vpack.c.b16 %v1154, %v1153
  %v1224 = vpack.c.b16 %v1156, %v1155
  %v1225 = vpack.c.b16 %v1158, %v1157
  %v1226 = vpack.c.b16 %v1160, %v1159
  %v1227 = vpack.c.b16 %v1162, %v1161
  %v1228 = vpack.c.b16 %v1164, %v1163
  %v1229 = vpack.c.b16 %v1166, %v1165
  %v1230 = vpack.c.b16 %v1168, %v1167
  %v1231 = vpack.c.b16 %v1170, %v1169
  %v1232 = vpack.c.b16 %v1172, %v1171
  %v1233 = vpack.c.b16 %v1174, %v1173
  %v1234 = vpack.c.b16 %v1176, %v1175
  %v1235 = vpack.c.b16 %v1178, %v1177
  %v1236 = vpack.c.b16 %v1180, %v1179
  %v1237 = vpack.c.b16 %v1182, %v1181
  %v1238 = vpack.c.b16 %v1184, %v1183
  %v1239 = vpack.c.b16 %v1186, %v1185
  %v1240 = vpack.c.b16 %v1188, %v1187
  %v1241 = vpack.c.b16 %v1190, %v1189
  %v1242 = vpack.c.b16 %v1192, %v1191
  %v1243 = vpack.c.b16 %v1194, %v1193
  %v1244 = vpack.c.b16 %v1196, %v1195
  %v1245 = vpack.c.b16 %v1198, %v1197
  %v1246 = vpack.c.b16 %v1200, %v1199
  %v1247 = vpack.c.b16 %v1202, %v1201
  %v1248 = vpack.c.b16 %v1204, %v1203
  %v1249 = vpack.c.b16 %v1206, %v1205
  %v1250 = vpack.c.b16 %v1208, %v1207
  %v1251 = vpack.c.b16 %v1210, %v1209
  %v1252 = vpack.c.b16 %v1212, %v1211
  %1293 = vmatprep.subr.bf16.mxu0 0
  %1294 = vmatpush1.bf16.msra.mxu0 %v1213
  %1295 = vmatprep.subr.bf16.mxu0 0
  %1296 = vmatpush1.bf16.msra.mxu0 %v1214
  %1297 = vmatprep.subr.bf16.mxu0 0
  %1298 = vmatpush1.bf16.msra.mxu0 %v1215
  %1299 = vmatprep.subr.bf16.mxu0 0
  %1300 = vmatpush1.bf16.msra.mxu0 %v1216
  %1301 = vmatprep.subr.bf16.mxu0 0
  %1302 = vmatpush1.bf16.msra.mxu0 %v1217
  %1303 = vmatprep.subr.bf16.mxu0 0
  %1304 = vmatpush1.bf16.msra.mxu0 %v1218
  %1305 = vmatprep.subr.bf16.mxu0 0
  %1306 = vmatpush1.bf16.msra.mxu0 %v1219
  %1307 = vmatprep.subr.bf16.mxu0 0
  %1308 = vmatpush1.bf16.msra.mxu0 %v1220
  %1309 = vmatprep.subr.bf16.mxu0 0
  %1310 = vmatpush1.bf16.msra.mxu0 %v1221
  %1311 = vmatprep.subr.bf16.mxu0 0
  %1312 = vmatpush1.bf16.msra.mxu0 %v1222
  %1313 = vmatprep.subr.bf16.mxu0 0
  %1314 = vmatpush1.bf16.msra.mxu0 %v1223
  %1315 = vmatprep.subr.bf16.mxu0 0
  %1316 = vmatpush1.bf16.msra.mxu0 %v1224
  %1317 = vmatprep.subr.bf16.mxu0 0
  %1318 = vmatpush1.bf16.msra.mxu0 %v1225
  %1319 = vmatprep.subr.bf16.mxu0 0
  %1320 = vmatpush1.bf16.msra.mxu0 %v1226
  %1321 = vmatprep.subr.bf16.mxu0 0
  %1322 = vmatpush1.bf16.msra.mxu0 %v1227
  %1323 = vmatprep.subr.bf16.mxu0 0
  %1324 = vmatpush1.bf16.msra.mxu0 %v1228
  %1325 = vmatprep.mubr.bf16.mxu0 %v1044
  %1326 = vmatmul.mubr.bf16.gmra.mrb[0].mxu0 %v1043
  %v1327 = vpop.f32.mrb[0].mxu0
  %v1328 = vadd.f32 %v1015, %v1327
  %v1329 = vpop.f32.mrb[0].mxu0
  %v1330 = vpop.f32.mrb[0].mxu0
  %v1331 = vpop.f32.mrb[0].mxu0
  %1332 = vdwg.mxu0
  %1333 = vmatprep.subr.bf16.mxu0 0
  %1334 = vmatpush1.bf16.msra.mxu0 %v1229
  %1335 = vmatprep.subr.bf16.mxu0 0
  %1336 = vmatpush1.bf16.msra.mxu0 %v1230
  %1337 = vmatprep.subr.bf16.mxu0 0
  %1338 = vmatpush1.bf16.msra.mxu0 %v1231
  %1339 = vmatprep.subr.bf16.mxu0 0
  %1340 = vmatpush1.bf16.msra.mxu0 %v1232
  %1341 = vmatprep.subr.bf16.mxu0 0
  %1342 = vmatpush1.bf16.msra.mxu0 %v1233
  %1343 = vmatprep.subr.bf16.mxu0 0
  %1344 = vmatpush1.bf16.msra.mxu0 %v1234
  %1345 = vmatprep.subr.bf16.mxu0 0
  %1346 = vmatpush1.bf16.msra.mxu0 %v1235
  %1347 = vmatprep.subr.bf16.mxu0 0
  %1348 = vmatpush1.bf16.msra.mxu0 %v1236
  %1349 = vmatprep.subr.bf16.mxu0 0
  %1350 = vmatpush1.bf16.msra.mxu0 %v1237
  %1351 = vmatprep.subr.bf16.mxu0 0
  %1352 = vmatpush1.bf16.msra.mxu0 %v1238
  %1353 = vmatprep.subr.bf16.mxu0 0
  %1354 = vmatpush1.bf16.msra.mxu0 %v1239
  %1355 = vmatprep.subr.bf16.mxu0 0
  %1356 = vmatpush1.bf16.msra.mxu0 %v1240
  %1357 = vmatprep.subr.bf16.mxu0 0
  %1358 = vmatpush1.bf16.msra.mxu0 %v1241
  %1359 = vmatprep.subr.bf16.mxu0 0
  %1360 = vmatpush1.bf16.msra.mxu0 %v1242
  %1361 = vmatprep.subr.bf16.mxu0 0
  %1362 = vmatpush1.bf16.msra.mxu0 %v1243
  %1363 = vmatprep.subr.bf16.mxu0 0
  %1364 = vmatpush1.bf16.msra.mxu0 %v1244
  %1365 = vmatprep.mubr.bf16.mxu0 %v1046
  %1366 = vmatmul.mubr.bf16.gmra.mrb[0].mxu0 %v1045
  %v1367 = vpop.f32.mrb[0].mxu0
  %v1368 = vadd.f32 %v1328, %v1367
  %v1369 = vpop.f32.mrb[0].mxu0
  %v1370 = vpop.f32.mrb[0].mxu0
  %v1371 = vpop.f32.mrb[0].mxu0
  %1372 = vdwg.mxu0
  %1373 = vmatprep.subr.bf16.mxu0 0
  %1374 = vmatpush1.bf16.msra.mxu0 %v1245
  %1375 = vmatprep.subr.bf16.mxu0 0
  %1376 = vmatpush1.bf16.msra.mxu0 %v1246
  %1377 = vmatprep.subr.bf16.mxu0 0
  %1378 = vmatpush1.bf16.msra.mxu0 %v1247
  %1379 = vmatprep.subr.bf16.mxu0 0
  %1380 = vmatpush1.bf16.msra.mxu0 %v1248
  %1381 = vmatprep.subr.bf16.mxu0 0
  %1382 = vmatpush1.bf16.msra.mxu0 %v1249
  %1383 = vmatprep.subr.bf16.mxu0 0
  %1384 = vmatpush1.bf16.msra.mxu0 %v1250
  %1385 = vmatprep.subr.bf16.mxu0 0
  %1386 = vmatpush1.bf16.msra.mxu0 %v1251
  %1387 = vmatprep.subr.bf16.mxu0 0
  %1388 = vmatpush1.bf16.msra.mxu0 %v1252
  %1389 = vmatprep.subr.bf16.mxu0 0
  %1390 = vmatpush1.bf16.msra.mxu0 0
  %1391 = vmatprep.subr.bf16.mxu0 0
  %1392 = vmatpush1.bf16.msra.mxu0 0
  %1393 = vmatprep.subr.bf16.mxu0 0
  %1394 = vmatpush1.bf16.msra.mxu0 0
  %1395 = vmatprep.subr.bf16.mxu0 0
  %1396 = vmatpush1.bf16.msra.mxu0 0
  %1397 = vmatprep.subr.bf16.mxu0 0
  %1398 = vmatpush1.bf16.msra.mxu0 0
  %1399 = vmatprep.subr.bf16.mxu0 0
  %1400 = vmatpush1.bf16.msra.mxu0 0
  %1401 = vmatprep.subr.bf16.mxu0 0
  %1402 = vmatpush1.bf16.msra.mxu0 0
  %1403 = vmatprep.subr.bf16.mxu0 0
  %1404 = vmatpush1.bf16.msra.mxu0 0
  %1405 = vmatprep.mubr.bf16.mxu0 0
  %1406 = vmatmul.mubr.bf16.gmra.mrb[0].mxu0 %v1047
  %v1407 = vpop.f32.mrb[0].mxu0
  %v1408 = vadd.f32 %v1368, %v1407
  %v1409 = vpop.f32.mrb[0].mxu0
  %v1410 = vpop.f32.mrb[0].mxu0
  %v1411 = vpop.f32.mrb[0].mxu0
  %1412 = vdwg.mxu0
  %v1413 = vmul.f32 %v1408, %v1408
  %vm1414 = vcmask 1041408
  %v1415 = vsel %vm1414, %v1413, 0.0
  %1416 = vadd.xlane.f32.xlu0 %v1415
  %v1417 = vpop.xlane.xlu0 %1416
  %v1418 = vmax.f32 %v1417, 1e-24
  %v1419 = vrsqrt.pop %v1418
  %v1420 = vmul.f32 %v1408, %v1419
  %v1421 = vld [vmem:[%s1] sm:$0xff]
  %v1422 = vld [vmem:[%s1 + $0x8] sm:$0xff]
  %v1423 = vld [vmem:[%s1 + $0x10] sm:$0xf]
  %v1424 = vld [vmem:[%s1 + $0x14] sm:$0xff]
  %v1425 = vld [vmem:[%s1 + $0x1c] sm:$0xff]
  %v1426 = vld [vmem:[%s1 + $0x24] sm:$0xf]
  %v1427 = vld [vmem:[%s1 + $0x28] sm:$0xff]
  %v1428 = vld [vmem:[%s1 + $0x30] sm:$0xff]
  %v1429 = vld [vmem:[%s1 + $0x38] sm:$0xf]
  %v1430 = vld [vmem:[%s1 + $0x3c] sm:$0xff]
  %v1431 = vld [vmem:[%s1 + $0x44] sm:$0xff]
  %v1432 = vld [vmem:[%s1 + $0x4c] sm:$0xf]
  %v1433 = vld [vmem:[%s1 + $0x50] sm:$0xff]
  %v1434 = vld [vmem:[%s1 + $0x58] sm:$0xff]
  %v1435 = vld [vmem:[%s1 + $0x60] sm:$0xf]
  %v1436 = vld [vmem:[%s1 + $0x64] sm:$0xff]
  %v1437 = vld [vmem:[%s1 + $0x6c] sm:$0xff]
  %v1438 = vld [vmem:[%s1 + $0x74] sm:$0xf]
  %v1439 = vld [vmem:[%s1 + $0x78] sm:$0xff]
  %v1440 = vld [vmem:[%s1 + $0x80] sm:$0xff]
  %v1441 = vld [vmem:[%s1 + $0x88] sm:$0xf]
  %v1442 = vld [vmem:[%s1 + $0x8c] sm:$0xff]
  %v1443 = vld [vmem:[%s1 + $0x94] sm:$0xff]
  %v1444 = vld [vmem:[%s1 + $0x9c] sm:$0xf]
  %v1445 = vld [vmem:[%s1 + $0xa0] sm:$0xff]
  %v1446 = vld [vmem:[%s1 + $0xa8] sm:$0xff]
  %v1447 = vld [vmem:[%s1 + $0xb0] sm:$0xf]
  %v1448 = vld [vmem:[%s1 + $0xb4] sm:$0xff]
  %v1449 = vld [vmem:[%s1 + $0xbc] sm:$0xff]
  %v1450 = vld [vmem:[%s1 + $0xc4] sm:$0xf]
  %v1451 = vld [vmem:[%s1 + $0xc8] sm:$0xff]
  %v1452 = vld [vmem:[%s1 + $0xd0] sm:$0xff]
  %v1453 = vld [vmem:[%s1 + $0xd8] sm:$0xf]
  %v1454 = vld [vmem:[%s1 + $0xdc] sm:$0xff]
  %v1455 = vld [vmem:[%s1 + $0xe4] sm:$0xff]
  %v1456 = vld [vmem:[%s1 + $0xec] sm:$0xf]
  %v1457 = vld [vmem:[%s1 + $0xf0] sm:$0xff]
  %v1458 = vld [vmem:[%s1 + $0xf8] sm:$0xff]
  %v1459 = vld [vmem:[%s1 + $0x100] sm:$0xf]
  %v1460 = vld [vmem:[%s1 + $0x104] sm:$0xff]
  %v1461 = vld [vmem:[%s1 + $0x10c] sm:$0xff]
  %v1462 = vld [vmem:[%s1 + $0x114] sm:$0xf]
  %v1463 = vld [vmem:[%s1 + $0x118] sm:$0xff]
  %v1464 = vld [vmem:[%s1 + $0x120] sm:$0xff]
  %v1465 = vld [vmem:[%s1 + $0x128] sm:$0xf]
  %v1466 = vld [vmem:[%s1 + $0x12c] sm:$0xff]
  %v1467 = vld [vmem:[%s1 + $0x134] sm:$0xff]
  %v1468 = vld [vmem:[%s1 + $0x13c] sm:$0xf]
  %v1469 = vld [vmem:[%s1 + $0x140] sm:$0xff]
  %v1470 = vld [vmem:[%s1 + $0x148] sm:$0xff]
  %v1471 = vld [vmem:[%s1 + $0x150] sm:$0xf]
  %v1472 = vld [vmem:[%s1 + $0x154] sm:$0xff]
  %v1473 = vld [vmem:[%s1 + $0x15c] sm:$0xff]
  %v1474 = vld [vmem:[%s1 + $0x164] sm:$0xf]
  %v1475 = vld [vmem:[%s1 + $0x168] sm:$0xff]
  %v1476 = vld [vmem:[%s1 + $0x170] sm:$0xff]
  %v1477 = vld [vmem:[%s1 + $0x178] sm:$0xf]
  %v1478 = vld [vmem:[%s1 + $0x17c] sm:$0xff]
  %v1479 = vld [vmem:[%s1 + $0x184] sm:$0xff]
  %v1480 = vld [vmem:[%s1 + $0x18c] sm:$0xf]
  %v1481 = vld [vmem:[%s1 + $0x190] sm:$0xff]
  %v1482 = vld [vmem:[%s1 + $0x198] sm:$0xff]
  %v1483 = vld [vmem:[%s1 + $0x1a0] sm:$0xf]
  %v1484 = vld [vmem:[%s1 + $0x1a4] sm:$0xff]
  %v1485 = vld [vmem:[%s1 + $0x1ac] sm:$0xff]
  %v1486 = vld [vmem:[%s1 + $0x1b4] sm:$0xf]
  %v1487 = vld [vmem:[%s1 + $0x1b8] sm:$0xff]
  %v1488 = vld [vmem:[%s1 + $0x1c0] sm:$0xff]
  %v1489 = vld [vmem:[%s1 + $0x1c8] sm:$0xf]
  %v1490 = vld [vmem:[%s1 + $0x1cc] sm:$0xff]
  %v1491 = vld [vmem:[%s1 + $0x1d4] sm:$0xff]
  %v1492 = vld [vmem:[%s1 + $0x1dc] sm:$0xf]
  %v1493 = vld [vmem:[%s1 + $0x1e0] sm:$0xff]
  %v1494 = vld [vmem:[%s1 + $0x1e8] sm:$0xff]
  %v1495 = vld [vmem:[%s1 + $0x1f0] sm:$0xf]
  %v1496 = vld [vmem:[%s1 + $0x1f4] sm:$0xff]
  %v1497 = vld [vmem:[%s1 + $0x1fc] sm:$0xff]
  %v1498 = vld [vmem:[%s1 + $0x204] sm:$0xf]
  %v1499 = vld [vmem:[%s1 + $0x208] sm:$0xff]
  %v1500 = vld [vmem:[%s1 + $0x210] sm:$0xff]
  %v1501 = vld [vmem:[%s1 + $0x218] sm:$0xf]
  %v1502 = vld [vmem:[%s1 + $0x21c] sm:$0xff]
  %v1503 = vld [vmem:[%s1 + $0x224] sm:$0xff]
  %v1504 = vld [vmem:[%s1 + $0x22c] sm:$0xf]
  %v1505 = vld [vmem:[%s1 + $0x230] sm:$0xff]
  %v1506 = vld [vmem:[%s1 + $0x238] sm:$0xff]
  %v1507 = vld [vmem:[%s1 + $0x240] sm:$0xf]
  %v1508 = vld [vmem:[%s1 + $0x244] sm:$0xff]
  %v1509 = vld [vmem:[%s1 + $0x24c] sm:$0xff]
  %v1510 = vld [vmem:[%s1 + $0x254] sm:$0xf]
  %v1511 = vld [vmem:[%s1 + $0x258] sm:$0xff]
  %v1512 = vld [vmem:[%s1 + $0x260] sm:$0xff]
  %v1513 = vld [vmem:[%s1 + $0x268] sm:$0xf]
  %v1514 = vld [vmem:[%s1 + $0x26c] sm:$0xff]
  %v1515 = vld [vmem:[%s1 + $0x274] sm:$0xff]
  %v1516 = vld [vmem:[%s1 + $0x27c] sm:$0xf]
  %v1517 = vld [vmem:[%s1 + $0x280] sm:$0xff]
  %v1518 = vld [vmem:[%s1 + $0x288] sm:$0xff]
  %v1519 = vld [vmem:[%s1 + $0x290] sm:$0xf]
  %v1520 = vld [vmem:[%s1 + $0x294] sm:$0xff]
  %v1521 = vld [vmem:[%s1 + $0x29c] sm:$0xff]
  %v1522 = vld [vmem:[%s1 + $0x2a4] sm:$0xf]
  %v1523 = vld [vmem:[%s1 + $0x2a8] sm:$0xff]
  %v1524 = vld [vmem:[%s1 + $0x2b0] sm:$0xff]
  %v1525 = vld [vmem:[%s1 + $0x2b8] sm:$0xf]
  %v1526 = vld [vmem:[%s1 + $0x2bc] sm:$0xff]
  %v1527 = vld [vmem:[%s1 + $0x2c4] sm:$0xff]
  %v1528 = vld [vmem:[%s1 + $0x2cc] sm:$0xf]
  %v1529 = vld [vmem:[%s1 + $0x2d0] sm:$0xff]
  %v1530 = vld [vmem:[%s1 + $0x2d8] sm:$0xff]
  %v1531 = vld [vmem:[%s1 + $0x2e0] sm:$0xf]
  %v1532 = vld [vmem:[%s1 + $0x2e4] sm:$0xff]
  %v1533 = vld [vmem:[%s1 + $0x2ec] sm:$0xff]
  %v1534 = vld [vmem:[%s1 + $0x2f4] sm:$0xf]
  %v1535 = vld [vmem:[%s1 + $0x2f8] sm:$0xff]
  %v1536 = vld [vmem:[%s1 + $0x300] sm:$0xff]
  %v1537 = vld [vmem:[%s1 + $0x308] sm:$0xf]
  %v1538 = vld [vmem:[%s1 + $0x30c] sm:$0xff]
  %v1539 = vld [vmem:[%s1 + $0x314] sm:$0xff]
  %v1540 = vld [vmem:[%s1 + $0x31c] sm:$0xf]
  %v1541 = vld [vmem:[%s1 + $0x320] sm:$0xff]
  %v1542 = vld [vmem:[%s1 + $0x328] sm:$0xff]
  %v1543 = vld [vmem:[%s1 + $0x330] sm:$0xf]
  %v1544 = vld [vmem:[%s1 + $0x334] sm:$0xff]
  %v1545 = vld [vmem:[%s1 + $0x33c] sm:$0xff]
  %v1546 = vld [vmem:[%s1 + $0x344] sm:$0xf]
  %v1547 = vld [vmem:[%s1 + $0x348] sm:$0xff]
  %v1548 = vld [vmem:[%s1 + $0x350] sm:$0xff]
  %v1549 = vld [vmem:[%s1 + $0x358] sm:$0xf]
  %v1550 = vld [vmem:[%s1 + $0x35c] sm:$0xff]
  %v1551 = vld [vmem:[%s1 + $0x364] sm:$0xff]
  %v1552 = vld [vmem:[%s1 + $0x36c] sm:$0xf]
  %v1553 = vld [vmem:[%s1 + $0x370] sm:$0xff]
  %v1554 = vld [vmem:[%s1 + $0x378] sm:$0xff]
  %v1555 = vld [vmem:[%s1 + $0x380] sm:$0xf]
  %v1556 = vld [vmem:[%s1 + $0x384] sm:$0xff]
  %v1557 = vld [vmem:[%s1 + $0x38c] sm:$0xff]
  %v1558 = vld [vmem:[%s1 + $0x394] sm:$0xf]
  %v1559 = vld [vmem:[%s1 + $0x398] sm:$0xff]
  %v1560 = vld [vmem:[%s1 + $0x3a0] sm:$0xff]
  %v1561 = vld [vmem:[%s1 + $0x3a8] sm:$0xf]
  %v1562 = vld [vmem:[%s1 + $0x3ac] sm:$0xff]
  %v1563 = vld [vmem:[%s1 + $0x3b4] sm:$0xff]
  %v1564 = vld [vmem:[%s1 + $0x3bc] sm:$0xf]
  %v1565 = vld [vmem:[%s1 + $0x3c0] sm:$0xff]
  %v1566 = vld [vmem:[%s1 + $0x3c8] sm:$0xff]
  %v1567 = vld [vmem:[%s1 + $0x3d0] sm:$0xf]
  %v1568 = vld [vmem:[%s1 + $0x3d4] sm:$0xff]
  %v1569 = vld [vmem:[%s1 + $0x3dc] sm:$0xff]
  %v1570 = vld [vmem:[%s1 + $0x3e4] sm:$0xf]
  %v1571 = vld [vmem:[%s1 + $0x3e8] sm:$0xff]
  %v1572 = vld [vmem:[%s1 + $0x3f0] sm:$0xff]
  %v1573 = vld [vmem:[%s1 + $0x3f8] sm:$0xf]
  %v1574 = vld [vmem:[%s1 + $0x3fc] sm:$0xff]
  %v1575 = vld [vmem:[%s1 + $0x404] sm:$0xff]
  %v1576 = vld [vmem:[%s1 + $0x40c] sm:$0xf]
  %v1577 = vld [vmem:[%s1 + $0x410] sm:$0xff]
  %v1578 = vld [vmem:[%s1 + $0x418] sm:$0xff]
  %v1579 = vld [vmem:[%s1 + $0x420] sm:$0xf]
  %v1580 = vld [vmem:[%s1 + $0x424] sm:$0xff]
  %v1581 = vld [vmem:[%s1 + $0x42c] sm:$0xff]
  %v1582 = vld [vmem:[%s1 + $0x434] sm:$0xf]
  %v1583 = vld [vmem:[%s1 + $0x438] sm:$0xff]
  %v1584 = vld [vmem:[%s1 + $0x440] sm:$0xff]
  %v1585 = vld [vmem:[%s1 + $0x448] sm:$0xf]
  %v1586 = vld [vmem:[%s1 + $0x44c] sm:$0xff]
  %v1587 = vld [vmem:[%s1 + $0x454] sm:$0xff]
  %v1588 = vld [vmem:[%s1 + $0x45c] sm:$0xf]
  %v1589 = vld [vmem:[%s1 + $0x460] sm:$0xff]
  %v1590 = vld [vmem:[%s1 + $0x468] sm:$0xff]
  %v1591 = vld [vmem:[%s1 + $0x470] sm:$0xf]
  %v1592 = vld [vmem:[%s1 + $0x474] sm:$0xff]
  %v1593 = vld [vmem:[%s1 + $0x47c] sm:$0xff]
  %v1594 = vld [vmem:[%s1 + $0x484] sm:$0xf]
  %v1595 = vld [vmem:[%s1 + $0x488] sm:$0xff]
  %v1596 = vld [vmem:[%s1 + $0x490] sm:$0xff]
  %v1597 = vld [vmem:[%s1 + $0x498] sm:$0xf]
  %v1598 = vld [vmem:[%s1 + $0x49c] sm:$0xff]
  %v1599 = vld [vmem:[%s1 + $0x4a4] sm:$0xff]
  %v1600 = vld [vmem:[%s1 + $0x4ac] sm:$0xf]
  %v1601 = vld [vmem:[%s1 + $0x4b0] sm:$0xff]
  %v1602 = vld [vmem:[%s1 + $0x4b8] sm:$0xff]
  %v1603 = vld [vmem:[%s1 + $0x4c0] sm:$0xf]
  %v1604 = vld [vmem:[%s1 + $0x4c4] sm:$0xff]
  %v1605 = vld [vmem:[%s1 + $0x4cc] sm:$0xff]
  %v1606 = vld [vmem:[%s1 + $0x4d4] sm:$0xf]
  %v1607 = vld [vmem:[%s1 + $0x4d8] sm:$0xff]
  %v1608 = vld [vmem:[%s1 + $0x4e0] sm:$0xff]
  %v1609 = vld [vmem:[%s1 + $0x4e8] sm:$0xf]
  %v1610 = vld [vmem:[%s1 + $0x4ec] sm:$0xff]
  %v1611 = vld [vmem:[%s1 + $0x4f4] sm:$0xff]
  %v1612 = vld [vmem:[%s1 + $0x4fc] sm:$0xf]
  %v1613 = vunpack.c.l.bf16 %v1421
  %v1614 = vunpack.c.h.bf16 %v1421
  %v1615 = vunpack.c.l.bf16 %v1422
  %v1616 = vunpack.c.h.bf16 %v1422
  %v1617 = vunpack.c.l.bf16 %v1423
  %v1618 = vunpack.c.l.bf16 %v1424
  %v1619 = vunpack.c.h.bf16 %v1424
  %v1620 = vunpack.c.l.bf16 %v1425
  %v1621 = vunpack.c.h.bf16 %v1425
  %v1622 = vunpack.c.l.bf16 %v1426
  %v1623 = vunpack.c.l.bf16 %v1427
  %v1624 = vunpack.c.h.bf16 %v1427
  %v1625 = vunpack.c.l.bf16 %v1428
  %v1626 = vunpack.c.h.bf16 %v1428
  %v1627 = vunpack.c.l.bf16 %v1429
  %v1628 = vunpack.c.l.bf16 %v1430
  %v1629 = vunpack.c.h.bf16 %v1430
  %v1630 = vunpack.c.l.bf16 %v1431
  %v1631 = vunpack.c.h.bf16 %v1431
  %v1632 = vunpack.c.l.bf16 %v1432
  %v1633 = vunpack.c.l.bf16 %v1433
  %v1634 = vunpack.c.h.bf16 %v1433
  %v1635 = vunpack.c.l.bf16 %v1434
  %v1636 = vunpack.c.h.bf16 %v1434
  %v1637 = vunpack.c.l.bf16 %v1435
  %v1638 = vunpack.c.l.bf16 %v1436
  %v1639 = vunpack.c.h.bf16 %v1436
  %v1640 = vunpack.c.l.bf16 %v1437
  %v1641 = vunpack.c.h.bf16 %v1437
  %v1642 = vunpack.c.l.bf16 %v1438
  %v1643 = vunpack.c.l.bf16 %v1439
  %v1644 = vunpack.c.h.bf16 %v1439
  %v1645 = vunpack.c.l.bf16 %v1440
  %v1646 = vunpack.c.h.bf16 %v1440
  %v1647 = vunpack.c.l.bf16 %v1441
  %v1648 = vunpack.c.l.bf16 %v1442
  %v1649 = vunpack.c.h.bf16 %v1442
  %v1650 = vunpack.c.l.bf16 %v1443
  %v1651 = vunpack.c.h.bf16 %v1443
  %v1652 = vunpack.c.l.bf16 %v1444
  %v1653 = vunpack.c.l.bf16 %v1445
  %v1654 = vunpack.c.h.bf16 %v1445
  %v1655 = vunpack.c.l.bf16 %v1446
  %v1656 = vunpack.c.h.bf16 %v1446
  %v1657 = vunpack.c.l.bf16 %v1447
  %v1658 = vunpack.c.l.bf16 %v1448
  %v1659 = vunpack.c.h.bf16 %v1448
  %v1660 = vunpack.c.l.bf16 %v1449
  %v1661 = vunpack.c.h.bf16 %v1449
  %v1662 = vunpack.c.l.bf16 %v1450
  %v1663 = vunpack.c.l.bf16 %v1451
  %v1664 = vunpack.c.h.bf16 %v1451
  %v1665 = vunpack.c.l.bf16 %v1452
  %v1666 = vunpack.c.h.bf16 %v1452
  %v1667 = vunpack.c.l.bf16 %v1453
  %v1668 = vunpack.c.l.bf16 %v1454
  %v1669 = vunpack.c.h.bf16 %v1454
  %v1670 = vunpack.c.l.bf16 %v1455
  %v1671 = vunpack.c.h.bf16 %v1455
  %v1672 = vunpack.c.l.bf16 %v1456
  %v1673 = vunpack.c.l.bf16 %v1457
  %v1674 = vunpack.c.h.bf16 %v1457
  %v1675 = vunpack.c.l.bf16 %v1458
  %v1676 = vunpack.c.h.bf16 %v1458
  %v1677 = vunpack.c.l.bf16 %v1459
  %v1678 = vunpack.c.l.bf16 %v1460
  %v1679 = vunpack.c.h.bf16 %v1460
  %v1680 = vunpack.c.l.bf16 %v1461
  %v1681 = vunpack.c.h.bf16 %v1461
  %v1682 = vunpack.c.l.bf16 %v1462
  %v1683 = vunpack.c.l.bf16 %v1463
  %v1684 = vunpack.c.h.bf16 %v1463
  %v1685 = vunpack.c.l.bf16 %v1464
  %v1686 = vunpack.c.h.bf16 %v1464
  %v1687 = vunpack.c.l.bf16 %v1465
  %v1688 = vunpack.c.l.bf16 %v1466
  %v1689 = vunpack.c.h.bf16 %v1466
  %v1690 = vunpack.c.l.bf16 %v1467
  %v1691 = vunpack.c.h.bf16 %v1467
  %v1692 = vunpack.c.l.bf16 %v1468
  %v1693 = vunpack.c.l.bf16 %v1469
  %v1694 = vunpack.c.h.bf16 %v1469
  %v1695 = vunpack.c.l.bf16 %v1470
  %v1696 = vunpack.c.h.bf16 %v1470
  %v1697 = vunpack.c.l.bf16 %v1471
  %v1698 = vunpack.c.l.bf16 %v1472
  %v1699 = vunpack.c.h.bf16 %v1472
  %v1700 = vunpack.c.l.bf16 %v1473
  %v1701 = vunpack.c.h.bf16 %v1473
  %v1702 = vunpack.c.l.bf16 %v1474
  %v1703 = vunpack.c.l.bf16 %v1475
  %v1704 = vunpack.c.h.bf16 %v1475
  %v1705 = vunpack.c.l.bf16 %v1476
  %v1706 = vunpack.c.h.bf16 %v1476
  %v1707 = vunpack.c.l.bf16 %v1477
  %v1708 = vunpack.c.l.bf16 %v1478
  %v1709 = vunpack.c.h.bf16 %v1478
  %v1710 = vunpack.c.l.bf16 %v1479
  %v1711 = vunpack.c.h.bf16 %v1479
  %v1712 = vunpack.c.l.bf16 %v1480
  %v1713 = vunpack.c.l.bf16 %v1481
  %v1714 = vunpack.c.h.bf16 %v1481
  %v1715 = vunpack.c.l.bf16 %v1482
  %v1716 = vunpack.c.h.bf16 %v1482
  %v1717 = vunpack.c.l.bf16 %v1483
  %v1718 = vunpack.c.l.bf16 %v1484
  %v1719 = vunpack.c.h.bf16 %v1484
  %v1720 = vunpack.c.l.bf16 %v1485
  %v1721 = vunpack.c.h.bf16 %v1485
  %v1722 = vunpack.c.l.bf16 %v1486
  %v1723 = vunpack.c.l.bf16 %v1487
  %v1724 = vunpack.c.h.bf16 %v1487
  %v1725 = vunpack.c.l.bf16 %v1488
  %v1726 = vunpack.c.h.bf16 %v1488
  %v1727 = vunpack.c.l.bf16 %v1489
  %v1728 = vunpack.c.l.bf16 %v1490
  %v1729 = vunpack.c.h.bf16 %v1490
  %v1730 = vunpack.c.l.bf16 %v1491
  %v1731 = vunpack.c.h.bf16 %v1491
  %v1732 = vunpack.c.l.bf16 %v1492
  %v1733 = vunpack.c.l.bf16 %v1493
  %v1734 = vunpack.c.h.bf16 %v1493
  %v1735 = vunpack.c.l.bf16 %v1494
  %v1736 = vunpack.c.h.bf16 %v1494
  %v1737 = vunpack.c.l.bf16 %v1495
  %v1738 = vunpack.c.l.bf16 %v1496
  %v1739 = vunpack.c.h.bf16 %v1496
  %v1740 = vunpack.c.l.bf16 %v1497
  %v1741 = vunpack.c.h.bf16 %v1497
  %v1742 = vunpack.c.l.bf16 %v1498
  %v1743 = vunpack.c.l.bf16 %v1499
  %v1744 = vunpack.c.h.bf16 %v1499
  %v1745 = vunpack.c.l.bf16 %v1500
  %v1746 = vunpack.c.h.bf16 %v1500
  %v1747 = vunpack.c.l.bf16 %v1501
  %v1748 = vunpack.c.l.bf16 %v1502
  %v1749 = vunpack.c.h.bf16 %v1502
  %v1750 = vunpack.c.l.bf16 %v1503
  %v1751 = vunpack.c.h.bf16 %v1503
  %v1752 = vunpack.c.l.bf16 %v1504
  %v1753 = vunpack.c.l.bf16 %v1505
  %v1754 = vunpack.c.h.bf16 %v1505
  %v1755 = vunpack.c.l.bf16 %v1506
  %v1756 = vunpack.c.h.bf16 %v1506
  %v1757 = vunpack.c.l.bf16 %v1507
  %v1758 = vunpack.c.l.bf16 %v1508
  %v1759 = vunpack.c.h.bf16 %v1508
  %v1760 = vunpack.c.l.bf16 %v1509
  %v1761 = vunpack.c.h.bf16 %v1509
  %v1762 = vunpack.c.l.bf16 %v1510
  %v1763 = vunpack.c.l.bf16 %v1511
  %v1764 = vunpack.c.h.bf16 %v1511
  %v1765 = vunpack.c.l.bf16 %v1512
  %v1766 = vunpack.c.h.bf16 %v1512
  %v1767 = vunpack.c.l.bf16 %v1513
  %v1768 = vunpack.c.l.bf16 %v1514
  %v1769 = vunpack.c.h.bf16 %v1514
  %v1770 = vunpack.c.l.bf16 %v1515
  %v1771 = vunpack.c.h.bf16 %v1515
  %v1772 = vunpack.c.l.bf16 %v1516
  %v1773 = vunpack.c.l.bf16 %v1517
  %v1774 = vunpack.c.h.bf16 %v1517
  %v1775 = vunpack.c.l.bf16 %v1518
  %v1776 = vunpack.c.h.bf16 %v1518
  %v1777 = vunpack.c.l.bf16 %v1519
  %v1778 = vunpack.c.l.bf16 %v1520
  %v1779 = vunpack.c.h.bf16 %v1520
  %v1780 = vunpack.c.l.bf16 %v1521
  %v1781 = vunpack.c.h.bf16 %v1521
  %v1782 = vunpack.c.l.bf16 %v1522
  %v1783 = vunpack.c.l.bf16 %v1523
  %v1784 = vunpack.c.h.bf16 %v1523
  %v1785 = vunpack.c.l.bf16 %v1524
  %v1786 = vunpack.c.h.bf16 %v1524
  %v1787 = vunpack.c.l.bf16 %v1525
  %v1788 = vunpack.c.l.bf16 %v1526
  %v1789 = vunpack.c.h.bf16 %v1526
  %v1790 = vunpack.c.l.bf16 %v1527
  %v1791 = vunpack.c.h.bf16 %v1527
  %v1792 = vunpack.c.l.bf16 %v1528
  %v1793 = vunpack.c.l.bf16 %v1529
  %v1794 = vunpack.c.h.bf16 %v1529
  %v1795 = vunpack.c.l.bf16 %v1530
  %v1796 = vunpack.c.h.bf16 %v1530
  %v1797 = vunpack.c.l.bf16 %v1531
  %v1798 = vunpack.c.l.bf16 %v1532
  %v1799 = vunpack.c.h.bf16 %v1532
  %v1800 = vunpack.c.l.bf16 %v1533
  %v1801 = vunpack.c.h.bf16 %v1533
  %v1802 = vunpack.c.l.bf16 %v1534
  %v1803 = vunpack.c.l.bf16 %v1535
  %v1804 = vunpack.c.h.bf16 %v1535
  %v1805 = vunpack.c.l.bf16 %v1536
  %v1806 = vunpack.c.h.bf16 %v1536
  %v1807 = vunpack.c.l.bf16 %v1537
  %v1808 = vunpack.c.l.bf16 %v1538
  %v1809 = vunpack.c.h.bf16 %v1538
  %v1810 = vunpack.c.l.bf16 %v1539
  %v1811 = vunpack.c.h.bf16 %v1539
  %v1812 = vunpack.c.l.bf16 %v1540
  %v1813 = vunpack.c.l.bf16 %v1541
  %v1814 = vunpack.c.h.bf16 %v1541
  %v1815 = vunpack.c.l.bf16 %v1542
  %v1816 = vunpack.c.h.bf16 %v1542
  %v1817 = vunpack.c.l.bf16 %v1543
  %v1818 = vunpack.c.l.bf16 %v1544
  %v1819 = vunpack.c.h.bf16 %v1544
  %v1820 = vunpack.c.l.bf16 %v1545
  %v1821 = vunpack.c.h.bf16 %v1545
  %v1822 = vunpack.c.l.bf16 %v1546
  %v1823 = vunpack.c.l.bf16 %v1547
  %v1824 = vunpack.c.h.bf16 %v1547
  %v1825 = vunpack.c.l.bf16 %v1548
  %v1826 = vunpack.c.h.bf16 %v1548
  %v1827 = vunpack.c.l.bf16 %v1549
  %v1828 = vunpack.c.l.bf16 %v1550
  %v1829 = vunpack.c.h.bf16 %v1550
  %v1830 = vunpack.c.l.bf16 %v1551
  %v1831 = vunpack.c.h.bf16 %v1551
  %v1832 = vunpack.c.l.bf16 %v1552
  %v1833 = vunpack.c.l.bf16 %v1553
  %v1834 = vunpack.c.h.bf16 %v1553
  %v1835 = vunpack.c.l.bf16 %v1554
  %v1836 = vunpack.c.h.bf16 %v1554
  %v1837 = vunpack.c.l.bf16 %v1555
  %v1838 = vunpack.c.l.bf16 %v1556
  %v1839 = vunpack.c.h.bf16 %v1556
  %v1840 = vunpack.c.l.bf16 %v1557
  %v1841 = vunpack.c.h.bf16 %v1557
  %v1842 = vunpack.c.l.bf16 %v1558
  %v1843 = vunpack.c.l.bf16 %v1559
  %v1844 = vunpack.c.h.bf16 %v1559
  %v1845 = vunpack.c.l.bf16 %v1560
  %v1846 = vunpack.c.h.bf16 %v1560
  %v1847 = vunpack.c.l.bf16 %v1561
  %v1848 = vunpack.c.l.bf16 %v1562
  %v1849 = vunpack.c.h.bf16 %v1562
  %v1850 = vunpack.c.l.bf16 %v1563
  %v1851 = vunpack.c.h.bf16 %v1563
  %v1852 = vunpack.c.l.bf16 %v1564
  %v1853 = vunpack.c.l.bf16 %v1565
  %v1854 = vunpack.c.h.bf16 %v1565
  %v1855 = vunpack.c.l.bf16 %v1566
  %v1856 = vunpack.c.h.bf16 %v1566
  %v1857 = vunpack.c.l.bf16 %v1567
  %v1858 = vunpack.c.l.bf16 %v1568
  %v1859 = vunpack.c.h.bf16 %v1568
  %v1860 = vunpack.c.l.bf16 %v1569
  %v1861 = vunpack.c.h.bf16 %v1569
  %v1862 = vunpack.c.l.bf16 %v1570
  %v1863 = vunpack.c.l.bf16 %v1571
  %v1864 = vunpack.c.h.bf16 %v1571
  %v1865 = vunpack.c.l.bf16 %v1572
  %v1866 = vunpack.c.h.bf16 %v1572
  %v1867 = vunpack.c.l.bf16 %v1573
  %v1868 = vunpack.c.l.bf16 %v1574
  %v1869 = vunpack.c.h.bf16 %v1574
  %v1870 = vunpack.c.l.bf16 %v1575
  %v1871 = vunpack.c.h.bf16 %v1575
  %v1872 = vunpack.c.l.bf16 %v1576
  %v1873 = vunpack.c.l.bf16 %v1577
  %v1874 = vunpack.c.h.bf16 %v1577
  %v1875 = vunpack.c.l.bf16 %v1578
  %v1876 = vunpack.c.h.bf16 %v1578
  %v1877 = vunpack.c.l.bf16 %v1579
  %v1878 = vunpack.c.l.bf16 %v1580
  %v1879 = vunpack.c.h.bf16 %v1580
  %v1880 = vunpack.c.l.bf16 %v1581
  %v1881 = vunpack.c.h.bf16 %v1581
  %v1882 = vunpack.c.l.bf16 %v1582
  %v1883 = vunpack.c.l.bf16 %v1583
  %v1884 = vunpack.c.h.bf16 %v1583
  %v1885 = vunpack.c.l.bf16 %v1584
  %v1886 = vunpack.c.h.bf16 %v1584
  %v1887 = vunpack.c.l.bf16 %v1585
  %v1888 = vunpack.c.l.bf16 %v1586
  %v1889 = vunpack.c.h.bf16 %v1586
  %v1890 = vunpack.c.l.bf16 %v1587
  %v1891 = vunpack.c.h.bf16 %v1587
  %v1892 = vunpack.c.l.bf16 %v1588
  %v1893 = vunpack.c.l.bf16 %v1589
  %v1894 = vunpack.c.h.bf16 %v1589
  %v1895 = vunpack.c.l.bf16 %v1590
  %v1896 = vunpack.c.h.bf16 %v1590
  %v1897 = vunpack.c.l.bf16 %v1591
  %v1898 = vunpack.c.l.bf16 %v1592
  %v1899 = vunpack.c.h.bf16 %v1592
  %v1900 = vunpack.c.l.bf16 %v1593
  %v1901 = vunpack.c.h.bf16 %v1593
  %v1902 = vunpack.c.l.bf16 %v1594
  %v1903 = vunpack.c.l.bf16 %v1595
  %v1904 = vunpack.c.h.bf16 %v1595
  %v1905 = vunpack.c.l.bf16 %v1596
  %v1906 = vunpack.c.h.bf16 %v1596
  %v1907 = vunpack.c.l.bf16 %v1597
  %v1908 = vunpack.c.l.bf16 %v1598
  %v1909 = vunpack.c.h.bf16 %v1598
  %v1910 = vunpack.c.l.bf16 %v1599
  %v1911 = vunpack.c.h.bf16 %v1599
  %v1912 = vunpack.c.l.bf16 %v1600
  %v1913 = vunpack.c.l.bf16 %v1601
  %v1914 = vunpack.c.h.bf16 %v1601
  %v1915 = vunpack.c.l.bf16 %v1602
  %v1916 = vunpack.c.h.bf16 %v1602
  %v1917 = vunpack.c.l.bf16 %v1603
  %v1918 = vunpack.c.l.bf16 %v1604
  %v1919 = vunpack.c.h.bf16 %v1604
  %v1920 = vunpack.c.l.bf16 %v1605
  %v1921 = vunpack.c.h.bf16 %v1605
  %v1922 = vunpack.c.l.bf16 %v1606
  %v1923 = vunpack.c.l.bf16 %v1607
  %v1924 = vunpack.c.h.bf16 %v1607
  %v1925 = vunpack.c.l.bf16 %v1608
  %v1926 = vunpack.c.h.bf16 %v1608
  %v1927 = vunpack.c.l.bf16 %v1609
  %v1928 = vunpack.c.l.bf16 %v1610
  %v1929 = vunpack.c.h.bf16 %v1610
  %v1930 = vunpack.c.l.bf16 %v1611
  %v1931 = vunpack.c.h.bf16 %v1611
  %v1932 = vunpack.c.l.bf16 %v1612
  %v1933 = vadd.f32 %v1613, %v1618
  %v1934 = vadd.f32 %v1933, %v1623
  %v1935 = vadd.f32 %v1934, %v1628
  %v1936 = vadd.f32 %v1935, %v1633
  %v1937 = vadd.f32 %v1936, %v1638
  %v1938 = vadd.f32 %v1937, %v1643
  %v1939 = vadd.f32 %v1938, %v1648
  %v1940 = vadd.f32 %v1939, %v1653
  %v1941 = vadd.f32 %v1940, %v1658
  %v1942 = vadd.f32 %v1941, %v1663
  %v1943 = vadd.f32 %v1942, %v1668
  %v1944 = vadd.f32 %v1943, %v1673
  %v1945 = vadd.f32 %v1944, %v1678
  %v1946 = vadd.f32 %v1945, %v1683
  %v1947 = vadd.f32 %v1946, %v1688
  %v1948 = vadd.f32 %v1947, %v1693
  %v1949 = vadd.f32 %v1948, %v1698
  %v1950 = vadd.f32 %v1949, %v1703
  %v1951 = vadd.f32 %v1950, %v1708
  %v1952 = vadd.f32 %v1951, %v1713
  %v1953 = vadd.f32 %v1952, %v1718
  %v1954 = vadd.f32 %v1953, %v1723
  %v1955 = vadd.f32 %v1954, %v1728
  %v1956 = vadd.f32 %v1955, %v1733
  %v1957 = vadd.f32 %v1956, %v1738
  %v1958 = vadd.f32 %v1957, %v1743
  %v1959 = vadd.f32 %v1958, %v1748
  %v1960 = vadd.f32 %v1959, %v1753
  %v1961 = vadd.f32 %v1960, %v1758
  %v1962 = vadd.f32 %v1961, %v1763
  %v1963 = vadd.f32 %v1962, %v1768
  %v1964 = vrot.slane %v1963, 4
  %v1965 = vadd.f32 %v1963, %v1964
  %v1966 = vrot.slane %v1965, 2
  %v1967 = vadd.f32 %v1965, %v1966
  %v1968 = vrot.slane %v1967, 1
  %v1969 = vadd.f32 %v1967, %v1968
  %v1970 = vadd.f32 %v1614, %v1619
  %v1971 = vadd.f32 %v1970, %v1624
  %v1972 = vadd.f32 %v1971, %v1629
  %v1973 = vadd.f32 %v1972, %v1634
  %v1974 = vadd.f32 %v1973, %v1639
  %v1975 = vadd.f32 %v1974, %v1644
  %v1976 = vadd.f32 %v1975, %v1649
  %v1977 = vadd.f32 %v1976, %v1654
  %v1978 = vadd.f32 %v1977, %v1659
  %v1979 = vadd.f32 %v1978, %v1664
  %v1980 = vadd.f32 %v1979, %v1669
  %v1981 = vadd.f32 %v1980, %v1674
  %v1982 = vadd.f32 %v1981, %v1679
  %v1983 = vadd.f32 %v1982, %v1684
  %v1984 = vadd.f32 %v1983, %v1689
  %v1985 = vadd.f32 %v1984, %v1694
  %v1986 = vadd.f32 %v1985, %v1699
  %v1987 = vadd.f32 %v1986, %v1704
  %v1988 = vadd.f32 %v1987, %v1709
  %v1989 = vadd.f32 %v1988, %v1714
  %v1990 = vadd.f32 %v1989, %v1719
  %v1991 = vadd.f32 %v1990, %v1724
  %v1992 = vadd.f32 %v1991, %v1729
  %v1993 = vadd.f32 %v1992, %v1734
  %v1994 = vadd.f32 %v1993, %v1739
  %v1995 = vadd.f32 %v1994, %v1744
  %v1996 = vadd.f32 %v1995, %v1749
  %v1997 = vadd.f32 %v1996, %v1754
  %v1998 = vadd.f32 %v1997, %v1759
  %v1999 = vadd.f32 %v1998, %v1764
  %v2000 = vadd.f32 %v1999, %v1769
  %v2001 = vrot.slane %v2000, 4
  %v2002 = vadd.f32 %v2000, %v2001
  %v2003 = vrot.slane %v2002, 2
  %v2004 = vadd.f32 %v2002, %v2003
  %v2005 = vrot.slane %v2004, 1
  %v2006 = vadd.f32 %v2004, %v2005
  %v2007 = vadd.f32 %v1615, %v1620
  %v2008 = vadd.f32 %v2007, %v1625
  %v2009 = vadd.f32 %v2008, %v1630
  %v2010 = vadd.f32 %v2009, %v1635
  %v2011 = vadd.f32 %v2010, %v1640
  %v2012 = vadd.f32 %v2011, %v1645
  %v2013 = vadd.f32 %v2012, %v1650
  %v2014 = vadd.f32 %v2013, %v1655
  %v2015 = vadd.f32 %v2014, %v1660
  %v2016 = vadd.f32 %v2015, %v1665
  %v2017 = vadd.f32 %v2016, %v1670
  %v2018 = vadd.f32 %v2017, %v1675
  %v2019 = vadd.f32 %v2018, %v1680
  %v2020 = vadd.f32 %v2019, %v1685
  %v2021 = vadd.f32 %v2020, %v1690
  %v2022 = vadd.f32 %v2021, %v1695
  %v2023 = vadd.f32 %v2022, %v1700
  %v2024 = vadd.f32 %v2023, %v1705
  %v2025 = vadd.f32 %v2024, %v1710
  %v2026 = vadd.f32 %v2025, %v1715
  %v2027 = vadd.f32 %v2026, %v1720
  %v2028 = vadd.f32 %v2027, %v1725
  %v2029 = vadd.f32 %v2028, %v1730
  %v2030 = vadd.f32 %v2029, %v1735
  %v2031 = vadd.f32 %v2030, %v1740
  %v2032 = vadd.f32 %v2031, %v1745
  %v2033 = vadd.f32 %v2032, %v1750
  %v2034 = vadd.f32 %v2033, %v1755
  %v2035 = vadd.f32 %v2034, %v1760
  %v2036 = vadd.f32 %v2035, %v1765
  %v2037 = vadd.f32 %v2036, %v1770
  %v2038 = vrot.slane %v2037, 4
  %v2039 = vadd.f32 %v2037, %v2038
  %v2040 = vrot.slane %v2039, 2
  %v2041 = vadd.f32 %v2039, %v2040
  %v2042 = vrot.slane %v2041, 1
  %v2043 = vadd.f32 %v2041, %v2042
  %v2044 = vadd.f32 %v1616, %v1621
  %v2045 = vadd.f32 %v2044, %v1626
  %v2046 = vadd.f32 %v2045, %v1631
  %v2047 = vadd.f32 %v2046, %v1636
  %v2048 = vadd.f32 %v2047, %v1641
  %v2049 = vadd.f32 %v2048, %v1646
  %v2050 = vadd.f32 %v2049, %v1651
  %v2051 = vadd.f32 %v2050, %v1656
  %v2052 = vadd.f32 %v2051, %v1661
  %v2053 = vadd.f32 %v2052, %v1666
  %v2054 = vadd.f32 %v2053, %v1671
  %v2055 = vadd.f32 %v2054, %v1676
  %v2056 = vadd.f32 %v2055, %v1681
  %v2057 = vadd.f32 %v2056, %v1686
  %v2058 = vadd.f32 %v2057, %v1691
  %v2059 = vadd.f32 %v2058, %v1696
  %v2060 = vadd.f32 %v2059, %v1701
  %v2061 = vadd.f32 %v2060, %v1706
  %v2062 = vadd.f32 %v2061, %v1711
  %v2063 = vadd.f32 %v2062, %v1716
  %v2064 = vadd.f32 %v2063, %v1721
  %v2065 = vadd.f32 %v2064, %v1726
  %v2066 = vadd.f32 %v2065, %v1731
  %v2067 = vadd.f32 %v2066, %v1736
  %v2068 = vadd.f32 %v2067, %v1741
  %v2069 = vadd.f32 %v2068, %v1746
  %v2070 = vadd.f32 %v2069, %v1751
  %v2071 = vadd.f32 %v2070, %v1756
  %v2072 = vadd.f32 %v2071, %v1761
  %v2073 = vadd.f32 %v2072, %v1766
  %v2074 = vadd.f32 %v2073, %v1771
  %v2075 = vrot.slane %v2074, 4
  %v2076 = vadd.f32 %v2074, %v2075
  %v2077 = vrot.slane %v2076, 2
  %v2078 = vadd.f32 %v2076, %v2077
  %v2079 = vrot.slane %v2078, 1
  %v2080 = vadd.f32 %v2078, %v2079
  %v2081 = vadd.f32 %v1617, %v1622
  %v2082 = vadd.f32 %v2081, %v1627
  %v2083 = vadd.f32 %v2082, %v1632
  %v2084 = vadd.f32 %v2083, %v1637
  %v2085 = vadd.f32 %v2084, %v1642
  %v2086 = vadd.f32 %v2085, %v1647
  %v2087 = vadd.f32 %v2086, %v1652
  %v2088 = vadd.f32 %v2087, %v1657
  %v2089 = vadd.f32 %v2088, %v1662
  %v2090 = vadd.f32 %v2089, %v1667
  %v2091 = vadd.f32 %v2090, %v1672
  %v2092 = vadd.f32 %v2091, %v1677
  %v2093 = vadd.f32 %v2092, %v1682
  %v2094 = vadd.f32 %v2093, %v1687
  %v2095 = vadd.f32 %v2094, %v1692
  %v2096 = vadd.f32 %v2095, %v1697
  %v2097 = vadd.f32 %v2096, %v1702
  %v2098 = vadd.f32 %v2097, %v1707
  %v2099 = vadd.f32 %v2098, %v1712
  %v2100 = vadd.f32 %v2099, %v1717
  %v2101 = vadd.f32 %v2100, %v1722
  %v2102 = vadd.f32 %v2101, %v1727
  %v2103 = vadd.f32 %v2102, %v1732
  %v2104 = vadd.f32 %v2103, %v1737
  %v2105 = vadd.f32 %v2104, %v1742
  %v2106 = vadd.f32 %v2105, %v1747
  %v2107 = vadd.f32 %v2106, %v1752
  %v2108 = vadd.f32 %v2107, %v1757
  %v2109 = vadd.f32 %v2108, %v1762
  %v2110 = vadd.f32 %v2109, %v1767
  %v2111 = vadd.f32 %v2110, %v1772
  %v2112 = vrot.slane %v2111, 4
  %v2113 = vadd.f32 %v2111, %v2112
  %v2114 = vrot.slane %v2113, 2
  %v2115 = vadd.f32 %v2113, %v2114
  %v2116 = vrot.slane %v2115, 1
  %v2117 = vadd.f32 %v2115, %v2116
  %v2118 = vadd.f32 %v1773, %v1778
  %v2119 = vadd.f32 %v2118, %v1783
  %v2120 = vadd.f32 %v2119, %v1788
  %v2121 = vadd.f32 %v2120, %v1793
  %v2122 = vadd.f32 %v2121, %v1798
  %v2123 = vadd.f32 %v2122, %v1803
  %v2124 = vadd.f32 %v2123, %v1808
  %v2125 = vadd.f32 %v2124, %v1813
  %v2126 = vadd.f32 %v2125, %v1818
  %v2127 = vadd.f32 %v2126, %v1823
  %v2128 = vadd.f32 %v2127, %v1828
  %v2129 = vadd.f32 %v2128, %v1833
  %v2130 = vadd.f32 %v2129, %v1838
  %v2131 = vadd.f32 %v2130, %v1843
  %v2132 = vadd.f32 %v2131, %v1848
  %v2133 = vadd.f32 %v2132, %v1853
  %v2134 = vadd.f32 %v2133, %v1858
  %v2135 = vadd.f32 %v2134, %v1863
  %v2136 = vadd.f32 %v2135, %v1868
  %v2137 = vadd.f32 %v2136, %v1873
  %v2138 = vadd.f32 %v2137, %v1878
  %v2139 = vadd.f32 %v2138, %v1883
  %v2140 = vadd.f32 %v2139, %v1888
  %v2141 = vadd.f32 %v2140, %v1893
  %v2142 = vadd.f32 %v2141, %v1898
  %v2143 = vadd.f32 %v2142, %v1903
  %v2144 = vadd.f32 %v2143, %v1908
  %v2145 = vadd.f32 %v2144, %v1913
  %v2146 = vadd.f32 %v2145, %v1918
  %v2147 = vadd.f32 %v2146, %v1923
  %v2148 = vadd.f32 %v2147, %v1928
  %v2149 = vrot.slane %v2148, 4
  %v2150 = vadd.f32 %v2148, %v2149
  %v2151 = vrot.slane %v2150, 2
  %v2152 = vadd.f32 %v2150, %v2151
  %v2153 = vrot.slane %v2152, 1
  %v2154 = vadd.f32 %v2152, %v2153
  %v2155 = vadd.f32 %v1774, %v1779
  %v2156 = vadd.f32 %v2155, %v1784
  %v2157 = vadd.f32 %v2156, %v1789
  %v2158 = vadd.f32 %v2157, %v1794
  %v2159 = vadd.f32 %v2158, %v1799
  %v2160 = vadd.f32 %v2159, %v1804
  %v2161 = vadd.f32 %v2160, %v1809
  %v2162 = vadd.f32 %v2161, %v1814
  %v2163 = vadd.f32 %v2162, %v1819
  %v2164 = vadd.f32 %v2163, %v1824
  %v2165 = vadd.f32 %v2164, %v1829
  %v2166 = vadd.f32 %v2165, %v1834
  %v2167 = vadd.f32 %v2166, %v1839
  %v2168 = vadd.f32 %v2167, %v1844
  %v2169 = vadd.f32 %v2168, %v1849
  %v2170 = vadd.f32 %v2169, %v1854
  %v2171 = vadd.f32 %v2170, %v1859
  %v2172 = vadd.f32 %v2171, %v1864
  %v2173 = vadd.f32 %v2172, %v1869
  %v2174 = vadd.f32 %v2173, %v1874
  %v2175 = vadd.f32 %v2174, %v1879
  %v2176 = vadd.f32 %v2175, %v1884
  %v2177 = vadd.f32 %v2176, %v1889
  %v2178 = vadd.f32 %v2177, %v1894
  %v2179 = vadd.f32 %v2178, %v1899
  %v2180 = vadd.f32 %v2179, %v1904
  %v2181 = vadd.f32 %v2180, %v1909
  %v2182 = vadd.f32 %v2181, %v1914
  %v2183 = vadd.f32 %v2182, %v1919
  %v2184 = vadd.f32 %v2183, %v1924
  %v2185 = vadd.f32 %v2184, %v1929
  %v2186 = vrot.slane %v2185, 4
  %v2187 = vadd.f32 %v2185, %v2186
  %v2188 = vrot.slane %v2187, 2
  %v2189 = vadd.f32 %v2187, %v2188
  %v2190 = vrot.slane %v2189, 1
  %v2191 = vadd.f32 %v2189, %v2190
  %v2192 = vadd.f32 %v1775, %v1780
  %v2193 = vadd.f32 %v2192, %v1785
  %v2194 = vadd.f32 %v2193, %v1790
  %v2195 = vadd.f32 %v2194, %v1795
  %v2196 = vadd.f32 %v2195, %v1800
  %v2197 = vadd.f32 %v2196, %v1805
  %v2198 = vadd.f32 %v2197, %v1810
  %v2199 = vadd.f32 %v2198, %v1815
  %v2200 = vadd.f32 %v2199, %v1820
  %v2201 = vadd.f32 %v2200, %v1825
  %v2202 = vadd.f32 %v2201, %v1830
  %v2203 = vadd.f32 %v2202, %v1835
  %v2204 = vadd.f32 %v2203, %v1840
  %v2205 = vadd.f32 %v2204, %v1845
  %v2206 = vadd.f32 %v2205, %v1850
  %v2207 = vadd.f32 %v2206, %v1855
  %v2208 = vadd.f32 %v2207, %v1860
  %v2209 = vadd.f32 %v2208, %v1865
  %v2210 = vadd.f32 %v2209, %v1870
  %v2211 = vadd.f32 %v2210, %v1875
  %v2212 = vadd.f32 %v2211, %v1880
  %v2213 = vadd.f32 %v2212, %v1885
  %v2214 = vadd.f32 %v2213, %v1890
  %v2215 = vadd.f32 %v2214, %v1895
  %v2216 = vadd.f32 %v2215, %v1900
  %v2217 = vadd.f32 %v2216, %v1905
  %v2218 = vadd.f32 %v2217, %v1910
  %v2219 = vadd.f32 %v2218, %v1915
  %v2220 = vadd.f32 %v2219, %v1920
  %v2221 = vadd.f32 %v2220, %v1925
  %v2222 = vadd.f32 %v2221, %v1930
  %v2223 = vrot.slane %v2222, 4
  %v2224 = vadd.f32 %v2222, %v2223
  %v2225 = vrot.slane %v2224, 2
  %v2226 = vadd.f32 %v2224, %v2225
  %v2227 = vrot.slane %v2226, 1
  %v2228 = vadd.f32 %v2226, %v2227
  %v2229 = vadd.f32 %v1776, %v1781
  %v2230 = vadd.f32 %v2229, %v1786
  %v2231 = vadd.f32 %v2230, %v1791
  %v2232 = vadd.f32 %v2231, %v1796
  %v2233 = vadd.f32 %v2232, %v1801
  %v2234 = vadd.f32 %v2233, %v1806
  %v2235 = vadd.f32 %v2234, %v1811
  %v2236 = vadd.f32 %v2235, %v1816
  %v2237 = vadd.f32 %v2236, %v1821
  %v2238 = vadd.f32 %v2237, %v1826
  %v2239 = vadd.f32 %v2238, %v1831
  %v2240 = vadd.f32 %v2239, %v1836
  %v2241 = vadd.f32 %v2240, %v1841
  %v2242 = vadd.f32 %v2241, %v1846
  %v2243 = vadd.f32 %v2242, %v1851
  %v2244 = vadd.f32 %v2243, %v1856
  %v2245 = vadd.f32 %v2244, %v1861
  %v2246 = vadd.f32 %v2245, %v1866
  %v2247 = vadd.f32 %v2246, %v1871
  %v2248 = vadd.f32 %v2247, %v1876
  %v2249 = vadd.f32 %v2248, %v1881
  %v2250 = vadd.f32 %v2249, %v1886
  %v2251 = vadd.f32 %v2250, %v1891
  %v2252 = vadd.f32 %v2251, %v1896
  %v2253 = vadd.f32 %v2252, %v1901
  %v2254 = vadd.f32 %v2253, %v1906
  %v2255 = vadd.f32 %v2254, %v1911
  %v2256 = vadd.f32 %v2255, %v1916
  %v2257 = vadd.f32 %v2256, %v1921
  %v2258 = vadd.f32 %v2257, %v1926
  %v2259 = vadd.f32 %v2258, %v1931
  %v2260 = vrot.slane %v2259, 4
  %v2261 = vadd.f32 %v2259, %v2260
  %v2262 = vrot.slane %v2261, 2
  %v2263 = vadd.f32 %v2261, %v2262
  %v2264 = vrot.slane %v2263, 1
  %v2265 = vadd.f32 %v2263, %v2264
  %v2266 = vadd.f32 %v1777, %v1782
  %v2267 = vadd.f32 %v2266, %v1787
  %v2268 = vadd.f32 %v2267, %v1792
  %v2269 = vadd.f32 %v2268, %v1797
  %v2270 = vadd.f32 %v2269, %v1802
  %v2271 = vadd.f32 %v2270, %v1807
  %v2272 = vadd.f32 %v2271, %v1812
  %v2273 = vadd.f32 %v2272, %v1817
  %v2274 = vadd.f32 %v2273, %v1822
  %v2275 = vadd.f32 %v2274, %v1827
  %v2276 = vadd.f32 %v2275, %v1832
  %v2277 = vadd.f32 %v2276, %v1837
  %v2278 = vadd.f32 %v2277, %v1842
  %v2279 = vadd.f32 %v2278, %v1847
  %v2280 = vadd.f32 %v2279, %v1852
  %v2281 = vadd.f32 %v2280, %v1857
  %v2282 = vadd.f32 %v2281, %v1862
  %v2283 = vadd.f32 %v2282, %v1867
  %v2284 = vadd.f32 %v2283, %v1872
  %v2285 = vadd.f32 %v2284, %v1877
  %v2286 = vadd.f32 %v2285, %v1882
  %v2287 = vadd.f32 %v2286, %v1887
  %v2288 = vadd.f32 %v2287, %v1892
  %v2289 = vadd.f32 %v2288, %v1897
  %v2290 = vadd.f32 %v2289, %v1902
  %v2291 = vadd.f32 %v2290, %v1907
  %v2292 = vadd.f32 %v2291, %v1912
  %v2293 = vadd.f32 %v2292, %v1917
  %v2294 = vadd.f32 %v2293, %v1922
  %v2295 = vadd.f32 %v2294, %v1927
  %v2296 = vadd.f32 %v2295, %v1932
  %v2297 = vrot.slane %v2296, 4
  %v2298 = vadd.f32 %v2296, %v2297
  %v2299 = vrot.slane %v2298, 2
  %v2300 = vadd.f32 %v2298, %v2299
  %v2301 = vrot.slane %v2300, 1
  %v2302 = vadd.f32 %v2300, %v2301
  %v2303 = vmul.f32 %v1969, %v909
  %v2304 = vmul.f32 %v2006, %v909
  %v2305 = vmul.f32 %v2043, %v909
  %v2306 = vmul.f32 %v2080, %v909
  %v2307 = vmul.f32 %v2117, %v909
  %v2308 = vmul.f32 %v2154, %v909
  %v2309 = vmul.f32 %v2191, %v909
  %v2310 = vmul.f32 %v2228, %v909
  %v2311 = vmul.f32 %v2265, %v909
  %v2312 = vmul.f32 %v2302, %v909
  %v2313 = vpack.c.bf16 %v2303, %v2303
  %v2314 = vpack.c.bf16 %v2304, %v2304
  %v2315 = vpack.c.bf16 %v2305, %v2305
  %v2316 = vpack.c.bf16 %v2306, %v2306
  %v2317 = vpack.c.bf16 %v2307, %v2307
  %v2318 = vpack.c.bf16 %v2308, %v2308
  %v2319 = vpack.c.bf16 %v2309, %v2309
  %v2320 = vpack.c.bf16 %v2310, %v2310
  %v2321 = vpack.c.bf16 %v2311, %v2311
  %v2322 = vpack.c.bf16 %v2312, %v2312
  %v2333 = vunpack.c.l.b16 %v2313
  %v2334 = vunpack.c.l.b16 %v2314
  %v2335 = vunpack.c.l.b16 %v2315
  %v2336 = vunpack.c.l.b16 %v2316
  %v2337 = vunpack.c.l.b16 %v2317
  %v2338 = vunpack.c.l.b16 %v2318
  %v2339 = vunpack.c.l.b16 %v2319
  %v2340 = vunpack.c.l.b16 %v2320
  %v2341 = vunpack.c.l.b16 %v2321
  %v2342 = vunpack.c.l.b16 %v2322
  %v2343 = vsel %vm1037, %v2338, %v2333
  %v2344 = vsel %vm1037, %v2339, %v2334
  %v2345 = vsel %vm1037, %v2340, %v2335
  %v2346 = vsel %vm1037, %v2341, %v2336
  %v2347 = vsel %vm1037, %v2342, %v2337
  %v2348 = vpack.c.b16 %v2343, %v2343
  %v2349 = vpack.c.b16 %v2344, %v2344
  %v2350 = vpack.c.b16 %v2345, %v2345
  %v2351 = vpack.c.b16 %v2346, %v2346
  %v2352 = vpack.c.b16 %v2347, %v2347
  %2358 = vmatprep.subr.bf16.mxu0 0
  %2359 = vmatpush1.bf16.msra.mxu0 %v1213
  %2360 = vmatprep.subr.bf16.mxu0 0
  %2361 = vmatpush1.bf16.msra.mxu0 %v1214
  %2362 = vmatprep.subr.bf16.mxu0 0
  %2363 = vmatpush1.bf16.msra.mxu0 %v1215
  %2364 = vmatprep.subr.bf16.mxu0 0
  %2365 = vmatpush1.bf16.msra.mxu0 %v1216
  %2366 = vmatprep.subr.bf16.mxu0 0
  %2367 = vmatpush1.bf16.msra.mxu0 %v1217
  %2368 = vmatprep.subr.bf16.mxu0 0
  %2369 = vmatpush1.bf16.msra.mxu0 %v1218
  %2370 = vmatprep.subr.bf16.mxu0 0
  %2371 = vmatpush1.bf16.msra.mxu0 %v1219
  %2372 = vmatprep.subr.bf16.mxu0 0
  %2373 = vmatpush1.bf16.msra.mxu0 %v1220
  %2374 = vmatprep.subr.bf16.mxu0 0
  %2375 = vmatpush1.bf16.msra.mxu0 %v1221
  %2376 = vmatprep.subr.bf16.mxu0 0
  %2377 = vmatpush1.bf16.msra.mxu0 %v1222
  %2378 = vmatprep.subr.bf16.mxu0 0
  %2379 = vmatpush1.bf16.msra.mxu0 %v1223
  %2380 = vmatprep.subr.bf16.mxu0 0
  %2381 = vmatpush1.bf16.msra.mxu0 %v1224
  %2382 = vmatprep.subr.bf16.mxu0 0
  %2383 = vmatpush1.bf16.msra.mxu0 %v1225
  %2384 = vmatprep.subr.bf16.mxu0 0
  %2385 = vmatpush1.bf16.msra.mxu0 %v1226
  %2386 = vmatprep.subr.bf16.mxu0 0
  %2387 = vmatpush1.bf16.msra.mxu0 %v1227
  %2388 = vmatprep.subr.bf16.mxu0 0
  %2389 = vmatpush1.bf16.msra.mxu0 %v1228
  %2390 = vmatprep.mubr.bf16.mxu0 %v2349
  %2391 = vmatmul.mubr.bf16.gmra.mrb[0].mxu0 %v2348
  %v2392 = vpop.f32.mrb[0].mxu0
  %v2393 = vadd.f32 %v1015, %v2392
  %v2394 = vpop.f32.mrb[0].mxu0
  %v2395 = vpop.f32.mrb[0].mxu0
  %v2396 = vpop.f32.mrb[0].mxu0
  %2397 = vdwg.mxu0
  %2398 = vmatprep.subr.bf16.mxu0 0
  %2399 = vmatpush1.bf16.msra.mxu0 %v1229
  %2400 = vmatprep.subr.bf16.mxu0 0
  %2401 = vmatpush1.bf16.msra.mxu0 %v1230
  %2402 = vmatprep.subr.bf16.mxu0 0
  %2403 = vmatpush1.bf16.msra.mxu0 %v1231
  %2404 = vmatprep.subr.bf16.mxu0 0
  %2405 = vmatpush1.bf16.msra.mxu0 %v1232
  %2406 = vmatprep.subr.bf16.mxu0 0
  %2407 = vmatpush1.bf16.msra.mxu0 %v1233
  %2408 = vmatprep.subr.bf16.mxu0 0
  %2409 = vmatpush1.bf16.msra.mxu0 %v1234
  %2410 = vmatprep.subr.bf16.mxu0 0
  %2411 = vmatpush1.bf16.msra.mxu0 %v1235
  %2412 = vmatprep.subr.bf16.mxu0 0
  %2413 = vmatpush1.bf16.msra.mxu0 %v1236
  %2414 = vmatprep.subr.bf16.mxu0 0
  %2415 = vmatpush1.bf16.msra.mxu0 %v1237
  %2416 = vmatprep.subr.bf16.mxu0 0
  %2417 = vmatpush1.bf16.msra.mxu0 %v1238
  %2418 = vmatprep.subr.bf16.mxu0 0
  %2419 = vmatpush1.bf16.msra.mxu0 %v1239
  %2420 = vmatprep.subr.bf16.mxu0 0
  %2421 = vmatpush1.bf16.msra.mxu0 %v1240
  %2422 = vmatprep.subr.bf16.mxu0 0
  %2423 = vmatpush1.bf16.msra.mxu0 %v1241
  %2424 = vmatprep.subr.bf16.mxu0 0
  %2425 = vmatpush1.bf16.msra.mxu0 %v1242
  %2426 = vmatprep.subr.bf16.mxu0 0
  %2427 = vmatpush1.bf16.msra.mxu0 %v1243
  %2428 = vmatprep.subr.bf16.mxu0 0
  %2429 = vmatpush1.bf16.msra.mxu0 %v1244
  %2430 = vmatprep.mubr.bf16.mxu0 %v2351
  %2431 = vmatmul.mubr.bf16.gmra.mrb[0].mxu0 %v2350
  %v2432 = vpop.f32.mrb[0].mxu0
  %v2433 = vadd.f32 %v2393, %v2432
  %v2434 = vpop.f32.mrb[0].mxu0
  %v2435 = vpop.f32.mrb[0].mxu0
  %v2436 = vpop.f32.mrb[0].mxu0
  %2437 = vdwg.mxu0
  %2438 = vmatprep.subr.bf16.mxu0 0
  %2439 = vmatpush1.bf16.msra.mxu0 %v1245
  %2440 = vmatprep.subr.bf16.mxu0 0
  %2441 = vmatpush1.bf16.msra.mxu0 %v1246
  %2442 = vmatprep.subr.bf16.mxu0 0
  %2443 = vmatpush1.bf16.msra.mxu0 %v1247
  %2444 = vmatprep.subr.bf16.mxu0 0
  %2445 = vmatpush1.bf16.msra.mxu0 %v1248
  %2446 = vmatprep.subr.bf16.mxu0 0
  %2447 = vmatpush1.bf16.msra.mxu0 %v1249
  %2448 = vmatprep.subr.bf16.mxu0 0
  %2449 = vmatpush1.bf16.msra.mxu0 %v1250
  %2450 = vmatprep.subr.bf16.mxu0 0
  %2451 = vmatpush1.bf16.msra.mxu0 %v1251
  %2452 = vmatprep.subr.bf16.mxu0 0
  %2453 = vmatpush1.bf16.msra.mxu0 %v1252
  %2454 = vmatprep.subr.bf16.mxu0 0
  %2455 = vmatpush1.bf16.msra.mxu0 0
  %2456 = vmatprep.subr.bf16.mxu0 0
  %2457 = vmatpush1.bf16.msra.mxu0 0
  %2458 = vmatprep.subr.bf16.mxu0 0
  %2459 = vmatpush1.bf16.msra.mxu0 0
  %2460 = vmatprep.subr.bf16.mxu0 0
  %2461 = vmatpush1.bf16.msra.mxu0 0
  %2462 = vmatprep.subr.bf16.mxu0 0
  %2463 = vmatpush1.bf16.msra.mxu0 0
  %2464 = vmatprep.subr.bf16.mxu0 0
  %2465 = vmatpush1.bf16.msra.mxu0 0
  %2466 = vmatprep.subr.bf16.mxu0 0
  %2467 = vmatpush1.bf16.msra.mxu0 0
  %2468 = vmatprep.subr.bf16.mxu0 0
  %2469 = vmatpush1.bf16.msra.mxu0 0
  %2470 = vmatprep.mubr.bf16.mxu0 0
  %2471 = vmatmul.mubr.bf16.gmra.mrb[0].mxu0 %v2352
  %v2472 = vpop.f32.mrb[0].mxu0
  %v2473 = vadd.f32 %v2433, %v2472
  %v2474 = vpop.f32.mrb[0].mxu0
  %v2475 = vpop.f32.mrb[0].mxu0
  %v2476 = vpop.f32.mrb[0].mxu0
  %2477 = vdwg.mxu0
  %v2478 = vmul.f32 %v2473, %v2473
  %v2479 = vsel %vm1414, %v2478, 0.0
  %2480 = vadd.xlane.f32.xlu0 %v2479
  %v2481 = vpop.xlane.xlu0 %2480
  %v2482 = vmax.f32 %v2481, 1e-24
  %v2483 = vrsqrt.pop %v2482
  %v2484 = vmul.f32 %v2473, %v2483
  %v2485 = vld [vmem:[%s4] sm:$0xff]
  %v2486 = vld [vmem:[%s4 + $0x8] sm:$0xff]
  %v2487 = vrot.slane %v2485, 4
  %v2488 = vadd.f32 %v2485, %v2487
  %v2489 = vrot.slane %v2488, 2
  %v2490 = vadd.f32 %v2488, %v2489
  %v2491 = vrot.slane %v2490, 1
  %v2492 = vadd.f32 %v2490, %v2491
  %v2493 = vrot.slane %v2486, 4
  %v2494 = vadd.f32 %v2486, %v2493
  %v2495 = vrot.slane %v2494, 2
  %v2496 = vadd.f32 %v2494, %v2495
  %v2497 = vrot.slane %v2496, 1
  %v2498 = vadd.f32 %v2496, %v2497
  %v2499 = vrcp.pop 8.0
  %v2500 = vmul.f32 %v2492, %v2499
  %v2501 = vmul.f32 %v2498, %v2499
  %v2502 = vpack.c.bf16 %v2500, %v2500
  %v2503 = vpack.c.bf16 %v2501, %v2501
  %v2504 = vld [vmem:[%s6] sm:$0xf]
  %v2505 = vld [vmem:[%s6 + $0x4] sm:$0xf]
  %v2506 = vld [vmem:[%s6 + $0x8] sm:$0xf]
  %v2507 = vld [vmem:[%s6 + $0xc] sm:$0xf]
  %v2508 = vld [vmem:[%s6 + $0x10] sm:$0xf]
  %v2509 = vld [vmem:[%s6 + $0x14] sm:$0xf]
  %v2510 = vld [vmem:[%s6 + $0x18] sm:$0xf]
  %v2511 = vld [vmem:[%s6 + $0x1c] sm:$0xf]
  %v2512 = vld [vmem:[%s6 + $0x20] sm:$0xf]
  %v2513 = vld [vmem:[%s6 + $0x24] sm:$0xf]
  %v2514 = vld [vmem:[%s6 + $0x28] sm:$0xf]
  %v2515 = vld [vmem:[%s6 + $0x2c] sm:$0xf]
  %v2516 = vld [vmem:[%s6 + $0x30] sm:$0xf]
  %v2517 = vld [vmem:[%s6 + $0x34] sm:$0xf]
  %v2518 = vld [vmem:[%s6 + $0x38] sm:$0xf]
  %v2519 = vld [vmem:[%s6 + $0x3c] sm:$0xf]
  %v2522 = vunpack.c.l.b16 %v2502
  %v2523 = vunpack.c.l.b16 %v2503
  %v2524 = vsel %vm1037, %v2523, %v2522
  %v2525 = vpack.c.b16 %v2524, %v2524
  %v2543 = vunpack.c.l.b16 %v2504
  %v2544 = vunpack.c.l.b16 %v2505
  %v2545 = vunpack.c.l.b16 %v2506
  %v2546 = vunpack.c.l.b16 %v2507
  %v2547 = vunpack.c.l.b16 %v2508
  %v2548 = vunpack.c.l.b16 %v2509
  %v2549 = vunpack.c.l.b16 %v2510
  %v2550 = vunpack.c.l.b16 %v2511
  %v2551 = vunpack.c.l.b16 %v2512
  %v2552 = vunpack.c.l.b16 %v2513
  %v2553 = vunpack.c.l.b16 %v2514
  %v2554 = vunpack.c.l.b16 %v2515
  %v2555 = vunpack.c.l.b16 %v2516
  %v2556 = vunpack.c.l.b16 %v2517
  %v2557 = vunpack.c.l.b16 %v2518
  %v2558 = vunpack.c.l.b16 %v2519
  %v2559 = vpack.c.b16 %v2544, %v2543
  %v2560 = vpack.c.b16 %v2546, %v2545
  %v2561 = vpack.c.b16 %v2548, %v2547
  %v2562 = vpack.c.b16 %v2550, %v2549
  %v2563 = vpack.c.b16 %v2552, %v2551
  %v2564 = vpack.c.b16 %v2554, %v2553
  %v2565 = vpack.c.b16 %v2556, %v2555
  %v2566 = vpack.c.b16 %v2558, %v2557
  %2575 = vmatprep.subr.bf16.mxu0 0
  %2576 = vmatpush1.bf16.msra.mxu0 %v2559
  %2577 = vmatprep.subr.bf16.mxu0 0
  %2578 = vmatpush1.bf16.msra.mxu0 %v2560
  %2579 = vmatprep.subr.bf16.mxu0 0
  %2580 = vmatpush1.bf16.msra.mxu0 %v2561
  %2581 = vmatprep.subr.bf16.mxu0 0
  %2582 = vmatpush1.bf16.msra.mxu0 %v2562
  %2583 = vmatprep.subr.bf16.mxu0 0
  %2584 = vmatpush1.bf16.msra.mxu0 %v2563
  %2585 = vmatprep.subr.bf16.mxu0 0
  %2586 = vmatpush1.bf16.msra.mxu0 %v2564
  %2587 = vmatprep.subr.bf16.mxu0 0
  %2588 = vmatpush1.bf16.msra.mxu0 %v2565
  %2589 = vmatprep.subr.bf16.mxu0 0
  %2590 = vmatpush1.bf16.msra.mxu0 %v2566
  %2591 = vmatprep.subr.bf16.mxu0 0
  %2592 = vmatpush1.bf16.msra.mxu0 0
  %2593 = vmatprep.subr.bf16.mxu0 0
  %2594 = vmatpush1.bf16.msra.mxu0 0
  %2595 = vmatprep.subr.bf16.mxu0 0
  %2596 = vmatpush1.bf16.msra.mxu0 0
  %2597 = vmatprep.subr.bf16.mxu0 0
  %2598 = vmatpush1.bf16.msra.mxu0 0
  %2599 = vmatprep.subr.bf16.mxu0 0
  %2600 = vmatpush1.bf16.msra.mxu0 0
  %2601 = vmatprep.subr.bf16.mxu0 0
  %2602 = vmatpush1.bf16.msra.mxu0 0
  %2603 = vmatprep.subr.bf16.mxu0 0
  %2604 = vmatpush1.bf16.msra.mxu0 0
  %2605 = vmatprep.subr.bf16.mxu0 0
  %2606 = vmatpush1.bf16.msra.mxu0 0
  %2607 = vmatprep.mubr.bf16.mxu0 0
  %2608 = vmatmul.mubr.bf16.gmra.mrb[0].mxu0 %v2525
  %v2609 = vpop.f32.mrb[0].mxu0
  %v2610 = vadd.f32 0.0, %v2609
  %v2611 = vpop.f32.mrb[0].mxu0
  %v2612 = vpop.f32.mrb[0].mxu0
  %v2613 = vpop.f32.mrb[0].mxu0
  %2614 = vdwg.mxu0
  %v2615 = vmul.f32 %v2610, %v2610
  %v2616 = vsel %vm1414, %v2615, 0.0
  %2617 = vadd.xlane.f32.xlu0 %v2616
  %v2618 = vpop.xlane.xlu0 %2617
  %v2619 = vmax.f32 %v2618, 1e-24
  %v2620 = vrsqrt.pop %v2619
  %v2621 = vmul.f32 %v2610, %v2620
  %v2622 = vld [vmem:[%s5] sm:$0xff]
  %v2623 = vld [vmem:[%s5 + $0x8] sm:$0xff]
  %v2624 = vrot.slane %v2622, 4
  %v2625 = vadd.f32 %v2622, %v2624
  %v2626 = vrot.slane %v2625, 2
  %v2627 = vadd.f32 %v2625, %v2626
  %v2628 = vrot.slane %v2627, 1
  %v2629 = vadd.f32 %v2627, %v2628
  %v2630 = vrot.slane %v2623, 4
  %v2631 = vadd.f32 %v2623, %v2630
  %v2632 = vrot.slane %v2631, 2
  %v2633 = vadd.f32 %v2631, %v2632
  %v2634 = vrot.slane %v2633, 1
  %v2635 = vadd.f32 %v2633, %v2634
  %v2636 = vmul.f32 %v2629, %v2499
  %v2637 = vmul.f32 %v2635, %v2499
  %v2638 = vpack.c.bf16 %v2636, %v2636
  %v2639 = vpack.c.bf16 %v2637, %v2637
  %v2642 = vunpack.c.l.b16 %v2638
  %v2643 = vunpack.c.l.b16 %v2639
  %v2644 = vsel %vm1037, %v2643, %v2642
  %v2645 = vpack.c.b16 %v2644, %v2644
  %2647 = vmatprep.subr.bf16.mxu0 0
  %2648 = vmatpush1.bf16.msra.mxu0 %v2559
  %2649 = vmatprep.subr.bf16.mxu0 0
  %2650 = vmatpush1.bf16.msra.mxu0 %v2560
  %2651 = vmatprep.subr.bf16.mxu0 0
  %2652 = vmatpush1.bf16.msra.mxu0 %v2561
  %2653 = vmatprep.subr.bf16.mxu0 0
  %2654 = vmatpush1.bf16.msra.mxu0 %v2562
  %2655 = vmatprep.subr.bf16.mxu0 0
  %2656 = vmatpush1.bf16.msra.mxu0 %v2563
  %2657 = vmatprep.subr.bf16.mxu0 0
  %2658 = vmatpush1.bf16.msra.mxu0 %v2564
  %2659 = vmatprep.subr.bf16.mxu0 0
  %2660 = vmatpush1.bf16.msra.mxu0 %v2565
  %2661 = vmatprep.subr.bf16.mxu0 0
  %2662 = vmatpush1.bf16.msra.mxu0 %v2566
  %2663 = vmatprep.subr.bf16.mxu0 0
  %2664 = vmatpush1.bf16.msra.mxu0 0
  %2665 = vmatprep.subr.bf16.mxu0 0
  %2666 = vmatpush1.bf16.msra.mxu0 0
  %2667 = vmatprep.subr.bf16.mxu0 0
  %2668 = vmatpush1.bf16.msra.mxu0 0
  %2669 = vmatprep.subr.bf16.mxu0 0
  %2670 = vmatpush1.bf16.msra.mxu0 0
  %2671 = vmatprep.subr.bf16.mxu0 0
  %2672 = vmatpush1.bf16.msra.mxu0 0
  %2673 = vmatprep.subr.bf16.mxu0 0
  %2674 = vmatpush1.bf16.msra.mxu0 0
  %2675 = vmatprep.subr.bf16.mxu0 0
  %2676 = vmatpush1.bf16.msra.mxu0 0
  %2677 = vmatprep.subr.bf16.mxu0 0
  %2678 = vmatpush1.bf16.msra.mxu0 0
  %2679 = vmatprep.mubr.bf16.mxu0 0
  %2680 = vmatmul.mubr.bf16.gmra.mrb[0].mxu0 %v2645
  %v2681 = vpop.f32.mrb[0].mxu0
  %v2682 = vadd.f32 0.0, %v2681
  %v2683 = vpop.f32.mrb[0].mxu0
  %v2684 = vpop.f32.mrb[0].mxu0
  %v2685 = vpop.f32.mrb[0].mxu0
  %2686 = vdwg.mxu0
  %v2687 = vmul.f32 %v2682, %v2682
  %v2688 = vsel %vm1414, %v2687, 0.0
  %2689 = vadd.xlane.f32.xlu0 %v2688
  %v2690 = vpop.xlane.xlu0 %2689
  %v2691 = vmax.f32 %v2690, 1e-24
  %v2692 = vrsqrt.pop %v2691
  %v2693 = vmul.f32 %v2682, %v2692
  %v2694 = vmul.f32 %v1420, %v2621
  %v2695 = vsel %vm1414, %v2694, 0.0
  %2696 = vadd.xlane.f32.xlu0 %v2695
  %v2697 = vpop.xlane.xlu0 %2696
  %v2698 = vmul.f32 %v1420, %v1420
  %v2699 = vsel %vm1414, %v2698, 0.0
  %2700 = vadd.xlane.f32.xlu0 %v2699
  %v2701 = vpop.xlane.xlu0 %2700
  %v2702 = vmul.f32 %v2621, %v2621
  %v2703 = vsel %vm1414, %v2702, 0.0
  %2704 = vadd.xlane.f32.xlu0 %v2703
  %v2705 = vpop.xlane.xlu0 %2704
  %v2706 = vmul.f32 %v2701, %v2705
  %v2707 = vmax.f32 %v2706, 1e-16
  %v2708 = vrsqrt.pop %v2707
  %v2709 = vmul.f32 %v2697, %v2708
  %v2710 = vmul.f32 %v2484, %v2693
  %v2711 = vsel %vm1414, %v2710, 0.0
  %2712 = vadd.xlane.f32.xlu0 %v2711
  %v2713 = vpop.xlane.xlu0 %2712
  %v2714 = vmul.f32 %v2484, %v2484
  %v2715 = vsel %vm1414, %v2714, 0.0
  %2716 = vadd.xlane.f32.xlu0 %v2715
  %v2717 = vpop.xlane.xlu0 %2716
  %v2718 = vmul.f32 %v2693, %v2693
  %v2719 = vsel %vm1414, %v2718, 0.0
  %2720 = vadd.xlane.f32.xlu0 %v2719
  %v2721 = vpop.xlane.xlu0 %2720
  %v2722 = vmul.f32 %v2717, %v2721
  %v2723 = vmax.f32 %v2722, 1e-16
  %v2724 = vrsqrt.pop %v2723
  %v2725 = vmul.f32 %v2713, %v2724
  %v2726 = vsub.f32 %v2484, %v1420
  %v2727 = vsub.f32 %v2693, %v2621
  %v2728 = vmul.f32 %v2726, %v2727
  %v2729 = vsel %vm1414, %v2728, 0.0
  %2730 = vadd.xlane.f32.xlu0 %v2729
  %v2731 = vpop.xlane.xlu0 %2730
  %v2732 = vmul.f32 %v2726, %v2726
  %v2733 = vsel %vm1414, %v2732, 0.0
  %2734 = vadd.xlane.f32.xlu0 %v2733
  %v2735 = vpop.xlane.xlu0 %2734
  %v2736 = vmul.f32 %v2727, %v2727
  %v2737 = vsel %vm1414, %v2736, 0.0
  %2738 = vadd.xlane.f32.xlu0 %v2737
  %v2739 = vpop.xlane.xlu0 %2738
  %v2740 = vmul.f32 %v2735, %v2739
  %v2741 = vmax.f32 %v2740, 1e-16
  %v2742 = vrsqrt.pop %v2741
  %v2743 = vmul.f32 %v2731, %v2742
  %v2744 = vmul.f32 %v1420, %v2484
  %v2745 = vsel %vm1414, %v2744, 0.0
  %2746 = vadd.xlane.f32.xlu0 %v2745
  %v2747 = vpop.xlane.xlu0 %2746
  %v2748 = vmul.f32 %v2701, %v2717
  %v2749 = vmax.f32 %v2748, 1e-16
  %v2750 = vrsqrt.pop %v2749
  %v2751 = vmul.f32 %v2747, %v2750
  %v2752 = vlaneseq
  %v2753 = vand.u32 %v2752, 127
  %vm2754 = vcmp.eq.s32.totalorder %v2753, 0
  %vm2755 = vcmp.eq.s32.totalorder %v2753, 1
  %vm2756 = vcmp.eq.s32.totalorder %v2753, 2
  %v2757 = vsel %vm2756, %v2743, %v2751
  %v2758 = vsel %vm2755, %v2725, %v2757
  %v2759 = vsel %vm2754, %v2709, %v2758
  %vm2760 = vcmask 25600
  %2761 = vst.msk [vmem:[%s7] sm:$0x3] %vm2760, %v2759
  // Predicated region
  $region30: #{clip_similarity_forward.1} parent=0 // pred_check
    _
  $region31: #{clip_similarity_forward.1} parent=0 // pred_check_branch
    %2763 = sbr.rel (0) target = $region33
  $region32: #{clip_similarity_forward.1} parent=0 // pred_region
    _
  $region33: #{clip_similarity_forward.1} parent=0 // pred_fallthru
    _
  // Predicated region
  $region34: #{clip_similarity_forward.1} parent=0 // pred_check
    _
  $region35: #{clip_similarity_forward.1} parent=0 // pred_check_branch
    %2765 = sbr.rel (0) target = $region37
  $region36: #{clip_similarity_forward.1} parent=0 // pred_region
    _
  $region37: #{clip_similarity_forward.1} parent=0 // pred_fallthru
    _

</llo_original>
